<compile_context>
chip_gen: v7x
topology: tpu7x:2x2x1
jax: 0.10.0
libtpu: 0.0.40
codegen_flags: <defaults>
</compile_context>

<pallas_src>
from collections import namedtuple

import jax
import jax.numpy as jnp
from jax.experimental import pallas as pl
from jax.experimental.pallas import tpu as pltpu

ModelOutput = namedtuple(
    "ModelOutput",
    ["pred_shape", "pred_theta_mats", "pred_rot6d", "pred_phi",
     "pred_delta_shape", "pred_leaf", "pred_uvd_jts", "pred_xyz_jts_24",
     "pred_xyz_jts_24_struct", "pred_xyz_jts_17", "pred_vertices", "maxvals"],
)

FEATURE_CHANNEL = 512        # NUM_LAYERS in {18, 34}
HIDDEN = 1024
NUM_JOINTS = 24
NUM_SHAPE = 10
NUM_PHI = 23 * 2             # 46
NUM_LEAF = 5 * 4             # 20
HEAD_DIM = NUM_SHAPE + NUM_PHI + NUM_LEAF   # 76
HEAD_PAD = 128               # pad fused head to a lane-dense 128 columns
ROOT_IDX_24 = 0


# ----------------------------------------------------------------------------
# Kernel
# ----------------------------------------------------------------------------
def _head_kernel(feat_ref, w_ref, b_ref, out_ref):
    # AdaptiveAvgPool2d(1) + flatten: (bb, C, H*W) -> (bb, C).
    # Last-axis reduce (XLU slot, off the MXU path), f32 throughout; the
    # pooled result is already lane-dense on C = 512.
    x0 = jnp.mean(feat_ref[...], axis=-1)

    # Single fused GEMM for fc1 @ fc2 @ [decshape|decphi|decleaf]
    # (weights pre-folded in f32; Dropout is identity at inference).
    out_ref[...] = (
        jnp.dot(x0, w_ref[...], preferred_element_type=jnp.float32) + b_ref[...]
    )


def _pick_block_b(batch):
    """Batch tile: multiple of 8 (sublane-friendly, lets v7x shard the batch
    grid across its two TensorCores) when it divides B, else the full batch."""
    for cand in (16, 8):
        if batch % cand == 0:
            return cand
    return batch


# ----------------------------------------------------------------------------
# Wrapper
# ----------------------------------------------------------------------------
@jax.jit
def simple3dpose_head(feat_nchw, pred_xyz_jts_24, kparams):
    """feat_nchw: (B, C, H, W) backbone features (f32); pred_xyz_jts_24: (B, 24, 3)."""
    B, C, H, W = feat_nchw.shape
    HW = H * W
    # Free metadata reshape — no transpose, no dtype copy, no extra HBM pass.
    feat = feat_nchw.reshape(B, C, HW)

    bb = _pick_block_b(B)
    grid = (B // bb,)

    # Right-size the VMEM claim from the actual (double-buffered) working set.
    buf_bytes = 2 * 4 * (bb * C * HW + C * HEAD_PAD + HEAD_PAD + bb * HEAD_PAD)
    vmem_limit = int(min(max(buf_bytes + (2 << 20), 8 << 20), 100 << 20))

    head_out = pl.pallas_call(
        _head_kernel,
        out_shape=jax.ShapeDtypeStruct((B, HEAD_PAD), jnp.float32),
        grid_spec=pltpu.PrefetchScalarGridSpec(
            num_scalar_prefetch=0,
            grid=grid,
            in_specs=[
                pl.BlockSpec((bb, C, HW), lambda i: (i, 0, 0)),
                pl.BlockSpec((C, HEAD_PAD), lambda i: (0, 0)),
                pl.BlockSpec((1, HEAD_PAD), lambda i: (0, 0)),
            ],
            out_specs=pl.BlockSpec((bb, HEAD_PAD), lambda i: (i, 0)),
        ),
        compiler_params=pltpu.CompilerParams(
            dimension_semantics=("parallel",),
            vmem_limit_bytes=vmem_limit,
        ),
    )(feat, kparams["w_fused"], kparams["b_fused"])

    # Slice the fused head output (plain JAX; XLA fuses these for free).
    delta_shape = head_out[:, :NUM_SHAPE]
    pred_shape = delta_shape + kparams["init_shape"]
    pred_phi = head_out[:, NUM_SHAPE:NUM_SHAPE + NUM_PHI].reshape(B, 23, 2)
    pred_leaf = head_out[:, NUM_SHAPE + NUM_PHI:HEAD_DIM].reshape(B, 5, 4)

    # Root-center the incoming 24-joint skeleton (tiny VPU work; done in the
    # wrapper to avoid padded (B,24,3) refs inside the kernel).
    xyz = pred_xyz_jts_24.astype(jnp.float32)
    pred_xyz_jts_24_out = (
        xyz - xyz[:, ROOT_IDX_24:ROOT_IDX_24 + 1, :]
    ).reshape(B, NUM_JOINTS * 3)

    # TODO(synk): output = self.smpl.hybrik(pose_skeleton=xyz_centered,
    #             betas=pred_shape, phis=pred_phi, leaf_thetas=pred_leaf)
    #             -> vertices / joints / rot_mats, then rotmat_to_rot6d.
    #             Requires SMPL model data; left unimplemented.
    return ModelOutput(
        pred_phi=pred_phi,
        pred_leaf=pred_leaf,
        pred_delta_shape=delta_shape,
        pred_shape=pred_shape,
        pred_theta_mats=None,
        pred_rot6d=None,
        pred_uvd_jts=None,
        pred_xyz_jts_24=pred_xyz_jts_24_out,
        pred_xyz_jts_24_struct=None,
        pred_xyz_jts_17=None,
        pred_vertices=None,
        maxvals=None,
    )


# ----------------------------------------------------------------------------
# Parameters
# ----------------------------------------------------------------------------
def init_params(key):
    """Deterministic synthetic parameters; nn.Linear(in, out) stored as (in, out)."""
    ks = jax.random.split(key, 6)

    def lin(k, fan_in, fan_out):
        return (jax.random.normal(k, (fan_in, fan_out), jnp.float32) * 0.02,
                jnp.zeros((1, fan_out), jnp.float32))

    w1, b1 = lin(ks[0], FEATURE_CHANNEL, HIDDEN)
    w2, b2 = lin(ks[1], HIDDEN, HIDDEN)
    wsh, bsh = lin(ks[2], HIDDEN, NUM_SHAPE)
    wphi, bphi = lin(ks[3], HIDDEN, NUM_PHI)
    wleaf, bleaf = lin(ks[4], HIDDEN, NUM_LEAF)
    # stand-in for np.load('data/smpl/h36m_mean_beta.npy')
    init_shape = jax.random.normal(ks[5], (1, NUM_SHAPE), jnp.float32) * 0.1
    return dict(w1=w1, b1=b1, w2=w2, b2=b2, wsh=wsh, bsh=bsh,
                wphi=wphi, bphi=bphi, wleaf=wleaf, bleaf=bleaf,
                init_shape=init_shape)


def prepare_params(params):
    """One-time offline fold of the activation-free fc1->fc2->head chain into a
    single (512, 128) weight / (1, 128) bias, computed in f32 at HIGHEST
    precision (more accurate than the unfolded bf16 chain, 26x less DMA)."""
    hi = jax.lax.Precision.HIGHEST
    wh = jnp.concatenate(
        [params["wsh"], params["wphi"], params["wleaf"]], axis=1)        # (1024, 76)
    bh = jnp.concatenate(
        [params["bsh"], params["bphi"], params["bleaf"]], axis=1)        # (1, 76)

    w12 = jnp.dot(params["w1"], params["w2"], precision=hi)              # (512, 1024)
    w_fused = jnp.dot(w12, wh, precision=hi)                             # (512, 76)
    b12 = jnp.dot(params["b1"], params["w2"], precision=hi) + params["b2"]
    b_fused = jnp.dot(b12, wh, precision=hi) + bh                        # (1, 76)

    w_fused = jnp.pad(w_fused, ((0, 0), (0, HEAD_PAD - HEAD_DIM)))       # (512, 128)
    b_fused = jnp.pad(b_fused, ((0, 0), (0, HEAD_PAD - HEAD_DIM)))       # (1, 128)
    return dict(
        w_fused=w_fused.astype(jnp.float32),
        b_fused=b_fused.astype(jnp.float32),
        init_shape=params["init_shape"].astype(jnp.float32),
    )


# ----------------------------------------------------------------------------
# Self-test
# ----------------------------------------------------------------------------
if __name__ == "__main__":
    key = jax.random.PRNGKey(0)
    k_feat, k_xyz, k_params = jax.random.split(key, 3)

    B, H, W = 2, 8, 8
    feat = jax.random.normal(k_feat, (B, FEATURE_CHANNEL, H, W), jnp.float32)
    pred_xyz_jts_24 = jax.random.normal(k_xyz, (B, NUM_JOINTS, 3), jnp.float32)
    params = init_params(k_params)
    kparams = prepare_params(params)

    out = simple3dpose_head(feat, pred_xyz_jts_24, kparams)
    jax.block_until_ready(out.pred_shape)
    jax.block_until_ready(out.pred_phi)
    jax.block_until_ready(out.pred_leaf)
    jax.block_until_ready(out.pred_xyz_jts_24)

    # --- tight check: mirror of the kernel math (fused weight, f32) ---
    pooled = feat.reshape(B, FEATURE_CHANNEL, H * W).mean(axis=-1)
    head = (jnp.dot(pooled, kparams["w_fused"],
                    preferred_element_type=jnp.float32) + kparams["b_fused"])
    assert jnp.allclose(out.pred_delta_shape, head[:, :NUM_SHAPE],
                        atol=5e-3, rtol=5e-3)
    assert jnp.allclose(out.pred_shape, head[:, :NUM_SHAPE] + params["init_shape"],
                        atol=5e-3, rtol=5e-3)
    assert jnp.allclose(out.pred_phi.reshape(B, -1),
                        head[:, NUM_SHAPE:NUM_SHAPE + NUM_PHI],
                        atol=5e-3, rtol=5e-3)
    assert jnp.allclose(out.pred_leaf.reshape(B, -1),
                        head[:, NUM_SHAPE + NUM_PHI:HEAD_DIM],
                        atol=5e-3, rtol=5e-3)

    # --- check against the full unfolded f32 PyTorch-equivalent math ---
    x0f = feat.reshape(B, FEATURE_CHANNEL, H * W).mean(-1)
    xcf = x0f @ params["w1"] + params["b1"]
    xcf = xcf @ params["w2"] + params["b2"]
    ref_shape_f32 = xcf @ params["wsh"] + params["bsh"] + params["init_shape"]
    ref_phi_f32 = xcf @ params["wphi"] + params["bphi"]
    ref_leaf_f32 = xcf @ params["wleaf"] + params["bleaf"]
    assert jnp.allclose(out.pred_shape, ref_shape_f32, atol=2e-2, rtol=2e-2)
    assert jnp.allclose(out.pred_phi.reshape(B, -1), ref_phi_f32,
                        atol=2e-2, rtol=2e-2)
    assert jnp.allclose(out.pred_leaf.reshape(B, -1), ref_leaf_f32,
                        atol=2e-2, rtol=2e-2)

    ref_xyz = (pred_xyz_jts_24 - pred_xyz_jts_24[:, :1, :]).reshape(B, 72)
    assert jnp.allclose(out.pred_xyz_jts_24, ref_xyz, atol=1e-5)

    print("KERNEL_OK")
</pallas_src>

<mosaic_0001>
module attributes {stable_mosaic.version = 11 : i64} {
  func.func @_head_kernel(%arg0: i32, %arg1: memref<2x512x64xf32, #tpu.memory_space<vmem>>, %arg2: memref<512x128xf32, #tpu.memory_space<vmem>>, %arg3: memref<1x128xf32, #tpu.memory_space<vmem>>, %arg4: memref<2x128xf32, #tpu.memory_space<vmem>>) attributes {dimension_semantics = [#tpu.dimension_semantics<parallel>], iteration_bounds = array<i64: 1>, scalar_prefetch = 0 : i64, scratch_operands = 0 : i64, tpu.core_type = #tpu.core_type<tc>, window_params = [{transform_indices = @transform_0, window_bounds = array<i64: 2, 512, 64>}, {pipeline_mode = #tpu.pipeline_mode<synchronous>, transform_indices = @transform_1, window_bounds = array<i64: 512, 128>}, {pipeline_mode = #tpu.pipeline_mode<synchronous>, transform_indices = @transform_2, window_bounds = array<i64: 1, 128>}, {transform_indices = @transform_3, window_bounds = array<i64: 2, 128>}]} {
    %c0 = arith.constant 0 : index
    %c0_0 = arith.constant 0 : index
    %c0_1 = arith.constant 0 : index
    %0 = vector.load %arg1[%c0, %c0_0, %c0_1] : memref<2x512x64xf32, #tpu.memory_space<vmem>>, vector<2x512x64xf32>
    %cst = arith.constant dense<0.000000e+00> : vector<2x512xf32>
    %1 = vector.multi_reduction <add>, %0, %cst [2] : vector<2x512x64xf32> to vector<2x512xf32>
    %cst_2 = arith.constant 6.400000e+01 : f32
    %2 = vector.broadcast %cst_2 : f32 to vector<2x512xf32>
    %3 = arith.divf %1, %2 : vector<2x512xf32>
    %c0_3 = arith.constant 0 : index
    %c0_4 = arith.constant 0 : index
    %4 = vector.load %arg2[%c0_3, %c0_4] : memref<512x128xf32, #tpu.memory_space<vmem>>, vector<512x128xf32>
    %cst_5 = arith.constant dense<0.000000e+00> : vector<2x128xf32>
    %5 = tpu.matmul %3, %4, %cst_5 {dimension_numbers = #tpu.dot_dimension_numbers<[1], [0], [0], [1], [0, 0, 1, 1], [], []>} : vector<2x512xf32>, vector<512x128xf32>, vector<2x128xf32> -> vector<2x128xf32>
    %c0_6 = arith.constant 0 : index
    %c0_7 = arith.constant 0 : index
    %6 = vector.load %arg3[%c0_6, %c0_7] : memref<1x128xf32, #tpu.memory_space<vmem>>, vector<1x128xf32>
    %7 = vector.broadcast %6 : vector<1x128xf32> to vector<2x128xf32>
    %8 = arith.addf %5, %7 : vector<2x128xf32>
    %c0_8 = arith.constant 0 : index
    %c0_9 = arith.constant 0 : index
    %9 = vector.load %arg4[%c0_8, %c0_9] : memref<2x128xf32, #tpu.memory_space<vmem>>, vector<2x128xf32>
    tpu.vector_store %arg4[%c0_8, %c0_9], %8 {strides = array<i32>} : memref<2x128xf32, #tpu.memory_space<vmem>>, vector<2x128xf32>,
    return
  }
  func.func @transform_0(%arg0: i32) -> (i32, i32, i32) {
    %c0_i32 = arith.constant 0 : i32
    %c0_i32_0 = arith.constant 0 : i32
    %c0_i32_1 = arith.constant 0 : i32
    return %arg0, %c0_i32, %c0_i32_0 : i32, i32, i32
  }
  func.func @transform_1(%arg0: i32) -> (i32, i32) {
    %c0_i32 = arith.constant 0 : i32
    %c0_i32_0 = arith.constant 0 : i32
    %c0_i32_1 = arith.constant 0 : i32
    return %c0_i32, %c0_i32_0 : i32, i32
  }
  func.func @transform_2(%arg0: i32) -> (i32, i32) {
    %c0_i32 = arith.constant 0 : i32
    %c0_i32_0 = arith.constant 0 : i32
    %c0_i32_1 = arith.constant 0 : i32
    return %c0_i32, %c0_i32_0 : i32, i32
  }
  func.func @transform_3(%arg0: i32) -> (i32, i32) {
    %c0_i32 = arith.constant 0 : i32
    %c0_i32_0 = arith.constant 0 : i32
    return %arg0, %c0_i32 : i32, i32
  }
}

</mosaic_0001>

<llo_original>
// kernel: simple3dpose_head.1
$region0: #{simple3dpose_head.1}
  #allocation0 [shape = 'u32[]', space=smem, size = 0x4, offset = 0x4, fixed_abs, tag = 'smem constant byte address 0x4 - core index']
  #allocation1 [shape = 'u32[144,128]{1,0:T(1,128)}', space=vmem, size = 0x12000, scoped, tag = 'internal scratch']
  %s0 = inlined_call_operand.vmem [shape: f32[2,512,64], index: 0, kind: input, shape index: {}]
  %s1 = inlined_call_operand.vmem [shape: f32[512,128], index: 1, kind: input, shape index: {}]
  %s2 = inlined_call_operand.vmem [shape: f32[1,128], index: 2, kind: input, shape index: {}]
  %s3 = inlined_call_operand.vmem [shape: f32[2,128], index: 3, kind: output, shape index: {}]
  %s4 = sld [smem:[#allocation0]]
  $region22: #{simple3dpose_head.1} parent=0
    _
  %s6 = ssub.s32 1, %s4
  %s7 = scalar_select 0, %s6, %s4
  // Predicated region
  $region2: #{simple3dpose_head.1} parent=0 // pred_check
    _
  $region3: #{simple3dpose_head.1} parent=0 // pred_check_branch
    %9 = sbr.rel (0) target = $region5
  $region4: #{simple3dpose_head.1} parent=0 // pred_region
    _
  $region5: #{simple3dpose_head.1} parent=0 // pred_fallthru
    _
  // Predicated region
  $region6: #{simple3dpose_head.1} parent=0 // pred_check
    _
  $region7: #{simple3dpose_head.1} parent=0 // pred_check_branch
    %11 = sbr.rel (0) target = $region9
  $region8: #{simple3dpose_head.1} parent=0 // pred_region
    _
  $region9: #{simple3dpose_head.1} parent=0 // pred_fallthru
    _
  // Predicated region
  $region10: #{simple3dpose_head.1} parent=0 // pred_check
    _
  $region11: #{simple3dpose_head.1} parent=0 // pred_check_branch
    %13 = sbr.rel (0) target = $region13
  $region12: #{simple3dpose_head.1} parent=0 // pred_region
    _
  $region13: #{simple3dpose_head.1} parent=0 // pred_fallthru
    _
  %v14 = vld [vmem:[%s0] sm:$0xff]
  %v15 = vld [vmem:[%s0 + $0x8] sm:$0xff]
  %v16 = vld [vmem:[%s0 + $0x10] sm:$0xff]
  %v17 = vld [vmem:[%s0 + $0x18] sm:$0xff]
  %v18 = vld [vmem:[%s0 + $0x20] sm:$0xff]
  %v19 = vld [vmem:[%s0 + $0x28] sm:$0xff]
  %v20 = vld [vmem:[%s0 + $0x30] sm:$0xff]
  %v21 = vld [vmem:[%s0 + $0x38] sm:$0xff]
  %v22 = vld [vmem:[%s0 + $0x40] sm:$0xff]
  %v23 = vld [vmem:[%s0 + $0x48] sm:$0xff]
  %v24 = vld [vmem:[%s0 + $0x50] sm:$0xff]
  %v25 = vld [vmem:[%s0 + $0x58] sm:$0xff]
  %v26 = vld [vmem:[%s0 + $0x60] sm:$0xff]
  %v27 = vld [vmem:[%s0 + $0x68] sm:$0xff]
  %v28 = vld [vmem:[%s0 + $0x70] sm:$0xff]
  %v29 = vld [vmem:[%s0 + $0x78] sm:$0xff]
  %v30 = vld [vmem:[%s0 + $0x80] sm:$0xff]
  %v31 = vld [vmem:[%s0 + $0x88] sm:$0xff]
  %v32 = vld [vmem:[%s0 + $0x90] sm:$0xff]
  %v33 = vld [vmem:[%s0 + $0x98] sm:$0xff]
  %v34 = vld [vmem:[%s0 + $0xa0] sm:$0xff]
  %v35 = vld [vmem:[%s0 + $0xa8] sm:$0xff]
  %v36 = vld [vmem:[%s0 + $0xb0] sm:$0xff]
  %v37 = vld [vmem:[%s0 + $0xb8] sm:$0xff]
  %v38 = vld [vmem:[%s0 + $0xc0] sm:$0xff]
  %v39 = vld [vmem:[%s0 + $0xc8] sm:$0xff]
  %v40 = vld [vmem:[%s0 + $0xd0] sm:$0xff]
  %v41 = vld [vmem:[%s0 + $0xd8] sm:$0xff]
  %v42 = vld [vmem:[%s0 + $0xe0] sm:$0xff]
  %v43 = vld [vmem:[%s0 + $0xe8] sm:$0xff]
  %v44 = vld [vmem:[%s0 + $0xf0] sm:$0xff]
  %v45 = vld [vmem:[%s0 + $0xf8] sm:$0xff]
  %v46 = vld [vmem:[%s0 + $0x100] sm:$0xff]
  %v47 = vld [vmem:[%s0 + $0x108] sm:$0xff]
  %v48 = vld [vmem:[%s0 + $0x110] sm:$0xff]
  %v49 = vld [vmem:[%s0 + $0x118] sm:$0xff]
  %v50 = vld [vmem:[%s0 + $0x120] sm:$0xff]
  %v51 = vld [vmem:[%s0 + $0x128] sm:$0xff]
  %v52 = vld [vmem:[%s0 + $0x130] sm:$0xff]
  %v53 = vld [vmem:[%s0 + $0x138] sm:$0xff]
  %v54 = vld [vmem:[%s0 + $0x140] sm:$0xff]
  %v55 = vld [vmem:[%s0 + $0x148] sm:$0xff]
  %v56 = vld [vmem:[%s0 + $0x150] sm:$0xff]
  %v57 = vld [vmem:[%s0 + $0x158] sm:$0xff]
  %v58 = vld [vmem:[%s0 + $0x160] sm:$0xff]
  %v59 = vld [vmem:[%s0 + $0x168] sm:$0xff]
  %v60 = vld [vmem:[%s0 + $0x170] sm:$0xff]
  %v61 = vld [vmem:[%s0 + $0x178] sm:$0xff]
  %v62 = vld [vmem:[%s0 + $0x180] sm:$0xff]
  %v63 = vld [vmem:[%s0 + $0x188] sm:$0xff]
  %v64 = vld [vmem:[%s0 + $0x190] sm:$0xff]
  %v65 = vld [vmem:[%s0 + $0x198] sm:$0xff]
  %v66 = vld [vmem:[%s0 + $0x1a0] sm:$0xff]
  %v67 = vld [vmem:[%s0 + $0x1a8] sm:$0xff]
  %v68 = vld [vmem:[%s0 + $0x1b0] sm:$0xff]
  %v69 = vld [vmem:[%s0 + $0x1b8] sm:$0xff]
  %v70 = vld [vmem:[%s0 + $0x1c0] sm:$0xff]
  %v71 = vld [vmem:[%s0 + $0x1c8] sm:$0xff]
  %v72 = vld [vmem:[%s0 + $0x1d0] sm:$0xff]
  %v73 = vld [vmem:[%s0 + $0x1d8] sm:$0xff]
  %v74 = vld [vmem:[%s0 + $0x1e0] sm:$0xff]
  %v75 = vld [vmem:[%s0 + $0x1e8] sm:$0xff]
  %v76 = vld [vmem:[%s0 + $0x1f0] sm:$0xff]
  %v77 = vld [vmem:[%s0 + $0x1f8] sm:$0xff]
  %v78 = vld [vmem:[%s0 + $0x200] sm:$0xff]
  %v79 = vld [vmem:[%s0 + $0x208] sm:$0xff]
  %v80 = vld [vmem:[%s0 + $0x210] sm:$0xff]
  %v81 = vld [vmem:[%s0 + $0x218] sm:$0xff]
  %v82 = vld [vmem:[%s0 + $0x220] sm:$0xff]
  %v83 = vld [vmem:[%s0 + $0x228] sm:$0xff]
  %v84 = vld [vmem:[%s0 + $0x230] sm:$0xff]
  %v85 = vld [vmem:[%s0 + $0x238] sm:$0xff]
  %v86 = vld [vmem:[%s0 + $0x240] sm:$0xff]
  %v87 = vld [vmem:[%s0 + $0x248] sm:$0xff]
  %v88 = vld [vmem:[%s0 + $0x250] sm:$0xff]
  %v89 = vld [vmem:[%s0 + $0x258] sm:$0xff]
  %v90 = vld [vmem:[%s0 + $0x260] sm:$0xff]
  %v91 = vld [vmem:[%s0 + $0x268] sm:$0xff]
  %v92 = vld [vmem:[%s0 + $0x270] sm:$0xff]
  %v93 = vld [vmem:[%s0 + $0x278] sm:$0xff]
  %v94 = vld [vmem:[%s0 + $0x280] sm:$0xff]
  %v95 = vld [vmem:[%s0 + $0x288] sm:$0xff]
  %v96 = vld [vmem:[%s0 + $0x290] sm:$0xff]
  %v97 = vld [vmem:[%s0 + $0x298] sm:$0xff]
  %v98 = vld [vmem:[%s0 + $0x2a0] sm:$0xff]
  %v99 = vld [vmem:[%s0 + $0x2a8] sm:$0xff]
  %v100 = vld [vmem:[%s0 + $0x2b0] sm:$0xff]
  %v101 = vld [vmem:[%s0 + $0x2b8] sm:$0xff]
  %v102 = vld [vmem:[%s0 + $0x2c0] sm:$0xff]
  %v103 = vld [vmem:[%s0 + $0x2c8] sm:$0xff]
  %v104 = vld [vmem:[%s0 + $0x2d0] sm:$0xff]
  %v105 = vld [vmem:[%s0 + $0x2d8] sm:$0xff]
  %v106 = vld [vmem:[%s0 + $0x2e0] sm:$0xff]
  %v107 = vld [vmem:[%s0 + $0x2e8] sm:$0xff]
  %v108 = vld [vmem:[%s0 + $0x2f0] sm:$0xff]
  %v109 = vld [vmem:[%s0 + $0x2f8] sm:$0xff]
  %v110 = vld [vmem:[%s0 + $0x300] sm:$0xff]
  %v111 = vld [vmem:[%s0 + $0x308] sm:$0xff]
  %v112 = vld [vmem:[%s0 + $0x310] sm:$0xff]
  %v113 = vld [vmem:[%s0 + $0x318] sm:$0xff]
  %v114 = vld [vmem:[%s0 + $0x320] sm:$0xff]
  %v115 = vld [vmem:[%s0 + $0x328] sm:$0xff]
  %v116 = vld [vmem:[%s0 + $0x330] sm:$0xff]
  %v117 = vld [vmem:[%s0 + $0x338] sm:$0xff]
  %v118 = vld [vmem:[%s0 + $0x340] sm:$0xff]
  %v119 = vld [vmem:[%s0 + $0x348] sm:$0xff]
  %v120 = vld [vmem:[%s0 + $0x350] sm:$0xff]
  %v121 = vld [vmem:[%s0 + $0x358] sm:$0xff]
  %v122 = vld [vmem:[%s0 + $0x360] sm:$0xff]
  %v123 = vld [vmem:[%s0 + $0x368] sm:$0xff]
  %v124 = vld [vmem:[%s0 + $0x370] sm:$0xff]
  %v125 = vld [vmem:[%s0 + $0x378] sm:$0xff]
  %v126 = vld [vmem:[%s0 + $0x380] sm:$0xff]
  %v127 = vld [vmem:[%s0 + $0x388] sm:$0xff]
  %v128 = vld [vmem:[%s0 + $0x390] sm:$0xff]
  %v129 = vld [vmem:[%s0 + $0x398] sm:$0xff]
  %v130 = vld [vmem:[%s0 + $0x3a0] sm:$0xff]
  %v131 = vld [vmem:[%s0 + $0x3a8] sm:$0xff]
  %v132 = vld [vmem:[%s0 + $0x3b0] sm:$0xff]
  %v133 = vld [vmem:[%s0 + $0x3b8] sm:$0xff]
  %v134 = vld [vmem:[%s0 + $0x3c0] sm:$0xff]
  %v135 = vld [vmem:[%s0 + $0x3c8] sm:$0xff]
  %v136 = vld [vmem:[%s0 + $0x3d0] sm:$0xff]
  %v137 = vld [vmem:[%s0 + $0x3d8] sm:$0xff]
  %v138 = vld [vmem:[%s0 + $0x3e0] sm:$0xff]
  %v139 = vld [vmem:[%s0 + $0x3e8] sm:$0xff]
  %v140 = vld [vmem:[%s0 + $0x3f0] sm:$0xff]
  %v141 = vld [vmem:[%s0 + $0x3f8] sm:$0xff]
  %vm142 = vcmask 523264
  %v143 = vsel %vm142, %v14, 0.0
  %144 = vadd.xlane.f32.xlu0 %v143
  %v145 = vpop.xlane.xlu0 %144
  %v146 = vsel %vm142, %v15, 0.0
  %147 = vadd.xlane.f32.xlu0 %v146
  %v148 = vpop.xlane.xlu0 %147
  %v149 = vsel %vm142, %v16, 0.0
  %150 = vadd.xlane.f32.xlu0 %v149
  %v151 = vpop.xlane.xlu0 %150
  %v152 = vsel %vm142, %v17, 0.0
  %153 = vadd.xlane.f32.xlu0 %v152
  %v154 = vpop.xlane.xlu0 %153
  %v155 = vsel %vm142, %v18, 0.0
  %156 = vadd.xlane.f32.xlu0 %v155
  %v157 = vpop.xlane.xlu0 %156
  %v158 = vsel %vm142, %v19, 0.0
  %159 = vadd.xlane.f32.xlu0 %v158
  %v160 = vpop.xlane.xlu0 %159
  %v161 = vsel %vm142, %v20, 0.0
  %162 = vadd.xlane.f32.xlu0 %v161
  %v163 = vpop.xlane.xlu0 %162
  %v164 = vsel %vm142, %v21, 0.0
  %165 = vadd.xlane.f32.xlu0 %v164
  %v166 = vpop.xlane.xlu0 %165
  %v167 = vsel %vm142, %v22, 0.0
  %168 = vadd.xlane.f32.xlu0 %v167
  %v169 = vpop.xlane.xlu0 %168
  %v170 = vsel %vm142, %v23, 0.0
  %171 = vadd.xlane.f32.xlu0 %v170
  %v172 = vpop.xlane.xlu0 %171
  %v173 = vsel %vm142, %v24, 0.0
  %174 = vadd.xlane.f32.xlu0 %v173
  %v175 = vpop.xlane.xlu0 %174
  %v176 = vsel %vm142, %v25, 0.0
  %177 = vadd.xlane.f32.xlu0 %v176
  %v178 = vpop.xlane.xlu0 %177
  %v179 = vsel %vm142, %v26, 0.0
  %180 = vadd.xlane.f32.xlu0 %v179
  %v181 = vpop.xlane.xlu0 %180
  %v182 = vsel %vm142, %v27, 0.0
  %183 = vadd.xlane.f32.xlu0 %v182
  %v184 = vpop.xlane.xlu0 %183
  %v185 = vsel %vm142, %v28, 0.0
  %186 = vadd.xlane.f32.xlu0 %v185
  %v187 = vpop.xlane.xlu0 %186
  %v188 = vsel %vm142, %v29, 0.0
  %189 = vadd.xlane.f32.xlu0 %v188
  %v190 = vpop.xlane.xlu0 %189
  %v191 = vsel %vm142, %v30, 0.0
  %192 = vadd.xlane.f32.xlu0 %v191
  %v193 = vpop.xlane.xlu0 %192
  %v194 = vsel %vm142, %v31, 0.0
  %195 = vadd.xlane.f32.xlu0 %v194
  %v196 = vpop.xlane.xlu0 %195
  %v197 = vsel %vm142, %v32, 0.0
  %198 = vadd.xlane.f32.xlu0 %v197
  %v199 = vpop.xlane.xlu0 %198
  %v200 = vsel %vm142, %v33, 0.0
  %201 = vadd.xlane.f32.xlu0 %v200
  %v202 = vpop.xlane.xlu0 %201
  %v203 = vsel %vm142, %v34, 0.0
  %204 = vadd.xlane.f32.xlu0 %v203
  %v205 = vpop.xlane.xlu0 %204
  %v206 = vsel %vm142, %v35, 0.0
  %207 = vadd.xlane.f32.xlu0 %v206
  %v208 = vpop.xlane.xlu0 %207
  %v209 = vsel %vm142, %v36, 0.0
  %210 = vadd.xlane.f32.xlu0 %v209
  %v211 = vpop.xlane.xlu0 %210
  %v212 = vsel %vm142, %v37, 0.0
  %213 = vadd.xlane.f32.xlu0 %v212
  %v214 = vpop.xlane.xlu0 %213
  %v215 = vsel %vm142, %v38, 0.0
  %216 = vadd.xlane.f32.xlu0 %v215
  %v217 = vpop.xlane.xlu0 %216
  %v218 = vsel %vm142, %v39, 0.0
  %219 = vadd.xlane.f32.xlu0 %v218
  %v220 = vpop.xlane.xlu0 %219
  %v221 = vsel %vm142, %v40, 0.0
  %222 = vadd.xlane.f32.xlu0 %v221
  %v223 = vpop.xlane.xlu0 %222
  %v224 = vsel %vm142, %v41, 0.0
  %225 = vadd.xlane.f32.xlu0 %v224
  %v226 = vpop.xlane.xlu0 %225
  %v227 = vsel %vm142, %v42, 0.0
  %228 = vadd.xlane.f32.xlu0 %v227
  %v229 = vpop.xlane.xlu0 %228
  %v230 = vsel %vm142, %v43, 0.0
  %231 = vadd.xlane.f32.xlu0 %v230
  %v232 = vpop.xlane.xlu0 %231
  %v233 = vsel %vm142, %v44, 0.0
  %234 = vadd.xlane.f32.xlu0 %v233
  %v235 = vpop.xlane.xlu0 %234
  %v236 = vsel %vm142, %v45, 0.0
  %237 = vadd.xlane.f32.xlu0 %v236
  %v238 = vpop.xlane.xlu0 %237
  %v239 = vsel %vm142, %v46, 0.0
  %240 = vadd.xlane.f32.xlu0 %v239
  %v241 = vpop.xlane.xlu0 %240
  %v242 = vsel %vm142, %v47, 0.0
  %243 = vadd.xlane.f32.xlu0 %v242
  %v244 = vpop.xlane.xlu0 %243
  %v245 = vsel %vm142, %v48, 0.0
  %246 = vadd.xlane.f32.xlu0 %v245
  %v247 = vpop.xlane.xlu0 %246
  %v248 = vsel %vm142, %v49, 0.0
  %249 = vadd.xlane.f32.xlu0 %v248
  %v250 = vpop.xlane.xlu0 %249
  %v251 = vsel %vm142, %v50, 0.0
  %252 = vadd.xlane.f32.xlu0 %v251
  %v253 = vpop.xlane.xlu0 %252
  %v254 = vsel %vm142, %v51, 0.0
  %255 = vadd.xlane.f32.xlu0 %v254
  %v256 = vpop.xlane.xlu0 %255
  %v257 = vsel %vm142, %v52, 0.0
  %258 = vadd.xlane.f32.xlu0 %v257
  %v259 = vpop.xlane.xlu0 %258
  %v260 = vsel %vm142, %v53, 0.0
  %261 = vadd.xlane.f32.xlu0 %v260
  %v262 = vpop.xlane.xlu0 %261
  %v263 = vsel %vm142, %v54, 0.0
  %264 = vadd.xlane.f32.xlu0 %v263
  %v265 = vpop.xlane.xlu0 %264
  %v266 = vsel %vm142, %v55, 0.0
  %267 = vadd.xlane.f32.xlu0 %v266
  %v268 = vpop.xlane.xlu0 %267
  %v269 = vsel %vm142, %v56, 0.0
  %270 = vadd.xlane.f32.xlu0 %v269
  %v271 = vpop.xlane.xlu0 %270
  %v272 = vsel %vm142, %v57, 0.0
  %273 = vadd.xlane.f32.xlu0 %v272
  %v274 = vpop.xlane.xlu0 %273
  %v275 = vsel %vm142, %v58, 0.0
  %276 = vadd.xlane.f32.xlu0 %v275
  %v277 = vpop.xlane.xlu0 %276
  %v278 = vsel %vm142, %v59, 0.0
  %279 = vadd.xlane.f32.xlu0 %v278
  %v280 = vpop.xlane.xlu0 %279
  %v281 = vsel %vm142, %v60, 0.0
  %282 = vadd.xlane.f32.xlu0 %v281
  %v283 = vpop.xlane.xlu0 %282
  %v284 = vsel %vm142, %v61, 0.0
  %285 = vadd.xlane.f32.xlu0 %v284
  %v286 = vpop.xlane.xlu0 %285
  %v287 = vsel %vm142, %v62, 0.0
  %288 = vadd.xlane.f32.xlu0 %v287
  %v289 = vpop.xlane.xlu0 %288
  %v290 = vsel %vm142, %v63, 0.0
  %291 = vadd.xlane.f32.xlu0 %v290
  %v292 = vpop.xlane.xlu0 %291
  %v293 = vsel %vm142, %v64, 0.0
  %294 = vadd.xlane.f32.xlu0 %v293
  %v295 = vpop.xlane.xlu0 %294
  %v296 = vsel %vm142, %v65, 0.0
  %297 = vadd.xlane.f32.xlu0 %v296
  %v298 = vpop.xlane.xlu0 %297
  %v299 = vsel %vm142, %v66, 0.0
  %300 = vadd.xlane.f32.xlu0 %v299
  %v301 = vpop.xlane.xlu0 %300
  %v302 = vsel %vm142, %v67, 0.0
  %303 = vadd.xlane.f32.xlu0 %v302
  %v304 = vpop.xlane.xlu0 %303
  %v305 = vsel %vm142, %v68, 0.0
  %306 = vadd.xlane.f32.xlu0 %v305
  %v307 = vpop.xlane.xlu0 %306
  %v308 = vsel %vm142, %v69, 0.0
  %309 = vadd.xlane.f32.xlu0 %v308
  %v310 = vpop.xlane.xlu0 %309
  %v311 = vsel %vm142, %v70, 0.0
  %312 = vadd.xlane.f32.xlu0 %v311
  %v313 = vpop.xlane.xlu0 %312
  %v314 = vsel %vm142, %v71, 0.0
  %315 = vadd.xlane.f32.xlu0 %v314
  %v316 = vpop.xlane.xlu0 %315
  %v317 = vsel %vm142, %v72, 0.0
  %318 = vadd.xlane.f32.xlu0 %v317
  %v319 = vpop.xlane.xlu0 %318
  %v320 = vsel %vm142, %v73, 0.0
  %321 = vadd.xlane.f32.xlu0 %v320
  %v322 = vpop.xlane.xlu0 %321
  %v323 = vsel %vm142, %v74, 0.0
  %324 = vadd.xlane.f32.xlu0 %v323
  %v325 = vpop.xlane.xlu0 %324
  %v326 = vsel %vm142, %v75, 0.0
  %327 = vadd.xlane.f32.xlu0 %v326
  %v328 = vpop.xlane.xlu0 %327
  %v329 = vsel %vm142, %v76, 0.0
  %330 = vadd.xlane.f32.xlu0 %v329
  %v331 = vpop.xlane.xlu0 %330
  %v332 = vsel %vm142, %v77, 0.0
  %333 = vadd.xlane.f32.xlu0 %v332
  %v334 = vpop.xlane.xlu0 %333
  %v335 = vsel %vm142, %v78, 0.0
  %336 = vadd.xlane.f32.xlu0 %v335
  %v337 = vpop.xlane.xlu0 %336
  %v338 = vsel %vm142, %v79, 0.0
  %339 = vadd.xlane.f32.xlu0 %v338
  %v340 = vpop.xlane.xlu0 %339
  %v341 = vsel %vm142, %v80, 0.0
  %342 = vadd.xlane.f32.xlu0 %v341
  %v343 = vpop.xlane.xlu0 %342
  %v344 = vsel %vm142, %v81, 0.0
  %345 = vadd.xlane.f32.xlu0 %v344
  %v346 = vpop.xlane.xlu0 %345
  %v347 = vsel %vm142, %v82, 0.0
  %348 = vadd.xlane.f32.xlu0 %v347
  %v349 = vpop.xlane.xlu0 %348
  %v350 = vsel %vm142, %v83, 0.0
  %351 = vadd.xlane.f32.xlu0 %v350
  %v352 = vpop.xlane.xlu0 %351
  %v353 = vsel %vm142, %v84, 0.0
  %354 = vadd.xlane.f32.xlu0 %v353
  %v355 = vpop.xlane.xlu0 %354
  %v356 = vsel %vm142, %v85, 0.0
  %357 = vadd.xlane.f32.xlu0 %v356
  %v358 = vpop.xlane.xlu0 %357
  %v359 = vsel %vm142, %v86, 0.0
  %360 = vadd.xlane.f32.xlu0 %v359
  %v361 = vpop.xlane.xlu0 %360
  %v362 = vsel %vm142, %v87, 0.0
  %363 = vadd.xlane.f32.xlu0 %v362
  %v364 = vpop.xlane.xlu0 %363
  %v365 = vsel %vm142, %v88, 0.0
  %366 = vadd.xlane.f32.xlu0 %v365
  %v367 = vpop.xlane.xlu0 %366
  %v368 = vsel %vm142, %v89, 0.0
  %369 = vadd.xlane.f32.xlu0 %v368
  %v370 = vpop.xlane.xlu0 %369
  %v371 = vsel %vm142, %v90, 0.0
  %372 = vadd.xlane.f32.xlu0 %v371
  %v373 = vpop.xlane.xlu0 %372
  %v374 = vsel %vm142, %v91, 0.0
  %375 = vadd.xlane.f32.xlu0 %v374
  %v376 = vpop.xlane.xlu0 %375
  %v377 = vsel %vm142, %v92, 0.0
  %378 = vadd.xlane.f32.xlu0 %v377
  %v379 = vpop.xlane.xlu0 %378
  %v380 = vsel %vm142, %v93, 0.0
  %381 = vadd.xlane.f32.xlu0 %v380
  %v382 = vpop.xlane.xlu0 %381
  %v383 = vsel %vm142, %v94, 0.0
  %384 = vadd.xlane.f32.xlu0 %v383
  %v385 = vpop.xlane.xlu0 %384
  %v386 = vsel %vm142, %v95, 0.0
  %387 = vadd.xlane.f32.xlu0 %v386
  %v388 = vpop.xlane.xlu0 %387
  %v389 = vsel %vm142, %v96, 0.0
  %390 = vadd.xlane.f32.xlu0 %v389
  %v391 = vpop.xlane.xlu0 %390
  %v392 = vsel %vm142, %v97, 0.0
  %393 = vadd.xlane.f32.xlu0 %v392
  %v394 = vpop.xlane.xlu0 %393
  %v395 = vsel %vm142, %v98, 0.0
  %396 = vadd.xlane.f32.xlu0 %v395
  %v397 = vpop.xlane.xlu0 %396
  %v398 = vsel %vm142, %v99, 0.0
  %399 = vadd.xlane.f32.xlu0 %v398
  %v400 = vpop.xlane.xlu0 %399
  %v401 = vsel %vm142, %v100, 0.0
  %402 = vadd.xlane.f32.xlu0 %v401
  %v403 = vpop.xlane.xlu0 %402
  %v404 = vsel %vm142, %v101, 0.0
  %405 = vadd.xlane.f32.xlu0 %v404
  %v406 = vpop.xlane.xlu0 %405
  %v407 = vsel %vm142, %v102, 0.0
  %408 = vadd.xlane.f32.xlu0 %v407
  %v409 = vpop.xlane.xlu0 %408
  %v410 = vsel %vm142, %v103, 0.0
  %411 = vadd.xlane.f32.xlu0 %v410
  %v412 = vpop.xlane.xlu0 %411
  %v413 = vsel %vm142, %v104, 0.0
  %414 = vadd.xlane.f32.xlu0 %v413
  %v415 = vpop.xlane.xlu0 %414
  %v416 = vsel %vm142, %v105, 0.0
  %417 = vadd.xlane.f32.xlu0 %v416
  %v418 = vpop.xlane.xlu0 %417
  %v419 = vsel %vm142, %v106, 0.0
  %420 = vadd.xlane.f32.xlu0 %v419
  %v421 = vpop.xlane.xlu0 %420
  %v422 = vsel %vm142, %v107, 0.0
  %423 = vadd.xlane.f32.xlu0 %v422
  %v424 = vpop.xlane.xlu0 %423
  %v425 = vsel %vm142, %v108, 0.0
  %426 = vadd.xlane.f32.xlu0 %v425
  %v427 = vpop.xlane.xlu0 %426
  %v428 = vsel %vm142, %v109, 0.0
  %429 = vadd.xlane.f32.xlu0 %v428
  %v430 = vpop.xlane.xlu0 %429
  %v431 = vsel %vm142, %v110, 0.0
  %432 = vadd.xlane.f32.xlu0 %v431
  %v433 = vpop.xlane.xlu0 %432
  %v434 = vsel %vm142, %v111, 0.0
  %435 = vadd.xlane.f32.xlu0 %v434
  %v436 = vpop.xlane.xlu0 %435
  %v437 = vsel %vm142, %v112, 0.0
  %438 = vadd.xlane.f32.xlu0 %v437
  %v439 = vpop.xlane.xlu0 %438
  %v440 = vsel %vm142, %v113, 0.0
  %441 = vadd.xlane.f32.xlu0 %v440
  %v442 = vpop.xlane.xlu0 %441
  %v443 = vsel %vm142, %v114, 0.0
  %444 = vadd.xlane.f32.xlu0 %v443
  %v445 = vpop.xlane.xlu0 %444
  %v446 = vsel %vm142, %v115, 0.0
  %447 = vadd.xlane.f32.xlu0 %v446
  %v448 = vpop.xlane.xlu0 %447
  %v449 = vsel %vm142, %v116, 0.0
  %450 = vadd.xlane.f32.xlu0 %v449
  %v451 = vpop.xlane.xlu0 %450
  %v452 = vsel %vm142, %v117, 0.0
  %453 = vadd.xlane.f32.xlu0 %v452
  %v454 = vpop.xlane.xlu0 %453
  %v455 = vsel %vm142, %v118, 0.0
  %456 = vadd.xlane.f32.xlu0 %v455
  %v457 = vpop.xlane.xlu0 %456
  %v458 = vsel %vm142, %v119, 0.0
  %459 = vadd.xlane.f32.xlu0 %v458
  %v460 = vpop.xlane.xlu0 %459
  %v461 = vsel %vm142, %v120, 0.0
  %462 = vadd.xlane.f32.xlu0 %v461
  %v463 = vpop.xlane.xlu0 %462
  %v464 = vsel %vm142, %v121, 0.0
  %465 = vadd.xlane.f32.xlu0 %v464
  %v466 = vpop.xlane.xlu0 %465
  %v467 = vsel %vm142, %v122, 0.0
  %468 = vadd.xlane.f32.xlu0 %v467
  %v469 = vpop.xlane.xlu0 %468
  %v470 = vsel %vm142, %v123, 0.0
  %471 = vadd.xlane.f32.xlu0 %v470
  %v472 = vpop.xlane.xlu0 %471
  %v473 = vsel %vm142, %v124, 0.0
  %474 = vadd.xlane.f32.xlu0 %v473
  %v475 = vpop.xlane.xlu0 %474
  %v476 = vsel %vm142, %v125, 0.0
  %477 = vadd.xlane.f32.xlu0 %v476
  %v478 = vpop.xlane.xlu0 %477
  %v479 = vsel %vm142, %v126, 0.0
  %480 = vadd.xlane.f32.xlu0 %v479
  %v481 = vpop.xlane.xlu0 %480
  %v482 = vsel %vm142, %v127, 0.0
  %483 = vadd.xlane.f32.xlu0 %v482
  %v484 = vpop.xlane.xlu0 %483
  %v485 = vsel %vm142, %v128, 0.0
  %486 = vadd.xlane.f32.xlu0 %v485
  %v487 = vpop.xlane.xlu0 %486
  %v488 = vsel %vm142, %v129, 0.0
  %489 = vadd.xlane.f32.xlu0 %v488
  %v490 = vpop.xlane.xlu0 %489
  %v491 = vsel %vm142, %v130, 0.0
  %492 = vadd.xlane.f32.xlu0 %v491
  %v493 = vpop.xlane.xlu0 %492
  %v494 = vsel %vm142, %v131, 0.0
  %495 = vadd.xlane.f32.xlu0 %v494
  %v496 = vpop.xlane.xlu0 %495
  %v497 = vsel %vm142, %v132, 0.0
  %498 = vadd.xlane.f32.xlu0 %v497
  %v499 = vpop.xlane.xlu0 %498
  %v500 = vsel %vm142, %v133, 0.0
  %501 = vadd.xlane.f32.xlu0 %v500
  %v502 = vpop.xlane.xlu0 %501
  %v503 = vsel %vm142, %v134, 0.0
  %504 = vadd.xlane.f32.xlu0 %v503
  %v505 = vpop.xlane.xlu0 %504
  %v506 = vsel %vm142, %v135, 0.0
  %507 = vadd.xlane.f32.xlu0 %v506
  %v508 = vpop.xlane.xlu0 %507
  %v509 = vsel %vm142, %v136, 0.0
  %510 = vadd.xlane.f32.xlu0 %v509
  %v511 = vpop.xlane.xlu0 %510
  %v512 = vsel %vm142, %v137, 0.0
  %513 = vadd.xlane.f32.xlu0 %v512
  %v514 = vpop.xlane.xlu0 %513
  %v515 = vsel %vm142, %v138, 0.0
  %516 = vadd.xlane.f32.xlu0 %v515
  %v517 = vpop.xlane.xlu0 %516
  %v518 = vsel %vm142, %v139, 0.0
  %519 = vadd.xlane.f32.xlu0 %v518
  %v520 = vpop.xlane.xlu0 %519
  %v521 = vsel %vm142, %v140, 0.0
  %522 = vadd.xlane.f32.xlu0 %v521
  %v523 = vpop.xlane.xlu0 %522
  %v524 = vsel %vm142, %v141, 0.0
  %525 = vadd.xlane.f32.xlu0 %v524
  %v526 = vpop.xlane.xlu0 %525
  %v527 = vrcp.pop 64.0
  %v528 = vmul.f32 %v145, %v527
  %v529 = vmul.f32 %v148, %v527
  %v530 = vmul.f32 %v151, %v527
  %v531 = vmul.f32 %v154, %v527
  %v532 = vmul.f32 %v157, %v527
  %v533 = vmul.f32 %v160, %v527
  %v534 = vmul.f32 %v163, %v527
  %v535 = vmul.f32 %v166, %v527
  %v536 = vmul.f32 %v169, %v527
  %v537 = vmul.f32 %v172, %v527
  %v538 = vmul.f32 %v175, %v527
  %v539 = vmul.f32 %v178, %v527
  %v540 = vmul.f32 %v181, %v527
  %v541 = vmul.f32 %v184, %v527
  %v542 = vmul.f32 %v187, %v527
  %v543 = vmul.f32 %v190, %v527
  %v544 = vmul.f32 %v193, %v527
  %v545 = vmul.f32 %v196, %v527
  %v546 = vmul.f32 %v199, %v527
  %v547 = vmul.f32 %v202, %v527
  %v548 = vmul.f32 %v205, %v527
  %v549 = vmul.f32 %v208, %v527
  %v550 = vmul.f32 %v211, %v527
  %v551 = vmul.f32 %v214, %v527
  %v552 = vmul.f32 %v217, %v527
  %v553 = vmul.f32 %v220, %v527
  %v554 = vmul.f32 %v223, %v527
  %v555 = vmul.f32 %v226, %v527
  %v556 = vmul.f32 %v229, %v527
  %v557 = vmul.f32 %v232, %v527
  %v558 = vmul.f32 %v235, %v527
  %v559 = vmul.f32 %v238, %v527
  %v560 = vmul.f32 %v241, %v527
  %v561 = vmul.f32 %v244, %v527
  %v562 = vmul.f32 %v247, %v527
  %v563 = vmul.f32 %v250, %v527
  %v564 = vmul.f32 %v253, %v527
  %v565 = vmul.f32 %v256, %v527
  %v566 = vmul.f32 %v259, %v527
  %v567 = vmul.f32 %v262, %v527
  %v568 = vmul.f32 %v265, %v527
  %v569 = vmul.f32 %v268, %v527
  %v570 = vmul.f32 %v271, %v527
  %v571 = vmul.f32 %v274, %v527
  %v572 = vmul.f32 %v277, %v527
  %v573 = vmul.f32 %v280, %v527
  %v574 = vmul.f32 %v283, %v527
  %v575 = vmul.f32 %v286, %v527
  %v576 = vmul.f32 %v289, %v527
  %v577 = vmul.f32 %v292, %v527
  %v578 = vmul.f32 %v295, %v527
  %v579 = vmul.f32 %v298, %v527
  %v580 = vmul.f32 %v301, %v527
  %v581 = vmul.f32 %v304, %v527
  %v582 = vmul.f32 %v307, %v527
  %v583 = vmul.f32 %v310, %v527
  %v584 = vmul.f32 %v313, %v527
  %v585 = vmul.f32 %v316, %v527
  %v586 = vmul.f32 %v319, %v527
  %v587 = vmul.f32 %v322, %v527
  %v588 = vmul.f32 %v325, %v527
  %v589 = vmul.f32 %v328, %v527
  %v590 = vmul.f32 %v331, %v527
  %v591 = vmul.f32 %v334, %v527
  %v592 = vmul.f32 %v337, %v527
  %v593 = vmul.f32 %v340, %v527
  %v594 = vmul.f32 %v343, %v527
  %v595 = vmul.f32 %v346, %v527
  %v596 = vmul.f32 %v349, %v527
  %v597 = vmul.f32 %v352, %v527
  %v598 = vmul.f32 %v355, %v527
  %v599 = vmul.f32 %v358, %v527
  %v600 = vmul.f32 %v361, %v527
  %v601 = vmul.f32 %v364, %v527
  %v602 = vmul.f32 %v367, %v527
  %v603 = vmul.f32 %v370, %v527
  %v604 = vmul.f32 %v373, %v527
  %v605 = vmul.f32 %v376, %v527
  %v606 = vmul.f32 %v379, %v527
  %v607 = vmul.f32 %v382, %v527
  %v608 = vmul.f32 %v385, %v527
  %v609 = vmul.f32 %v388, %v527
  %v610 = vmul.f32 %v391, %v527
  %v611 = vmul.f32 %v394, %v527
  %v612 = vmul.f32 %v397, %v527
  %v613 = vmul.f32 %v400, %v527
  %v614 = vmul.f32 %v403, %v527
  %v615 = vmul.f32 %v406, %v527
  %v616 = vmul.f32 %v409, %v527
  %v617 = vmul.f32 %v412, %v527
  %v618 = vmul.f32 %v415, %v527
  %v619 = vmul.f32 %v418, %v527
  %v620 = vmul.f32 %v421, %v527
  %v621 = vmul.f32 %v424, %v527
  %v622 = vmul.f32 %v427, %v527
  %v623 = vmul.f32 %v430, %v527
  %v624 = vmul.f32 %v433, %v527
  %v625 = vmul.f32 %v436, %v527
  %v626 = vmul.f32 %v439, %v527
  %v627 = vmul.f32 %v442, %v527
  %v628 = vmul.f32 %v445, %v527
  %v629 = vmul.f32 %v448, %v527
  %v630 = vmul.f32 %v451, %v527
  %v631 = vmul.f32 %v454, %v527
  %v632 = vmul.f32 %v457, %v527
  %v633 = vmul.f32 %v460, %v527
  %v634 = vmul.f32 %v463, %v527
  %v635 = vmul.f32 %v466, %v527
  %v636 = vmul.f32 %v469, %v527
  %v637 = vmul.f32 %v472, %v527
  %v638 = vmul.f32 %v475, %v527
  %v639 = vmul.f32 %v478, %v527
  %v640 = vmul.f32 %v481, %v527
  %v641 = vmul.f32 %v484, %v527
  %v642 = vmul.f32 %v487, %v527
  %v643 = vmul.f32 %v490, %v527
  %v644 = vmul.f32 %v493, %v527
  %v645 = vmul.f32 %v496, %v527
  %v646 = vmul.f32 %v499, %v527
  %v647 = vmul.f32 %v502, %v527
  %v648 = vmul.f32 %v505, %v527
  %v649 = vmul.f32 %v508, %v527
  %v650 = vmul.f32 %v511, %v527
  %v651 = vmul.f32 %v514, %v527
  %v652 = vmul.f32 %v517, %v527
  %v653 = vmul.f32 %v520, %v527
  %v654 = vmul.f32 %v523, %v527
  %v655 = vmul.f32 %v526, %v527
  %v656 = vld [vmem:[%s1] sm:$0xff]
  %v657 = vld [vmem:[%s1 + $0x8] sm:$0xff]
  %v658 = vld [vmem:[%s1 + $0x10] sm:$0xff]
  %v659 = vld [vmem:[%s1 + $0x18] sm:$0xff]
  %v660 = vld [vmem:[%s1 + $0x20] sm:$0xff]
  %v661 = vld [vmem:[%s1 + $0x28] sm:$0xff]
  %v662 = vld [vmem:[%s1 + $0x30] sm:$0xff]
  %v663 = vld [vmem:[%s1 + $0x38] sm:$0xff]
  %v664 = vld [vmem:[%s1 + $0x40] sm:$0xff]
  %v665 = vld [vmem:[%s1 + $0x48] sm:$0xff]
  %v666 = vld [vmem:[%s1 + $0x50] sm:$0xff]
  %v667 = vld [vmem:[%s1 + $0x58] sm:$0xff]
  %v668 = vld [vmem:[%s1 + $0x60] sm:$0xff]
  %v669 = vld [vmem:[%s1 + $0x68] sm:$0xff]
  %v670 = vld [vmem:[%s1 + $0x70] sm:$0xff]
  %v671 = vld [vmem:[%s1 + $0x78] sm:$0xff]
  %v672 = vld [vmem:[%s1 + $0x80] sm:$0xff]
  %v673 = vld [vmem:[%s1 + $0x88] sm:$0xff]
  %v674 = vld [vmem:[%s1 + $0x90] sm:$0xff]
  %v675 = vld [vmem:[%s1 + $0x98] sm:$0xff]
  %v676 = vld [vmem:[%s1 + $0xa0] sm:$0xff]
  %v677 = vld [vmem:[%s1 + $0xa8] sm:$0xff]
  %v678 = vld [vmem:[%s1 + $0xb0] sm:$0xff]
  %v679 = vld [vmem:[%s1 + $0xb8] sm:$0xff]
  %v680 = vld [vmem:[%s1 + $0xc0] sm:$0xff]
  %v681 = vld [vmem:[%s1 + $0xc8] sm:$0xff]
  %v682 = vld [vmem:[%s1 + $0xd0] sm:$0xff]
  %v683 = vld [vmem:[%s1 + $0xd8] sm:$0xff]
  %v684 = vld [vmem:[%s1 + $0xe0] sm:$0xff]
  %v685 = vld [vmem:[%s1 + $0xe8] sm:$0xff]
  %v686 = vld [vmem:[%s1 + $0xf0] sm:$0xff]
  %v687 = vld [vmem:[%s1 + $0xf8] sm:$0xff]
  %v688 = vld [vmem:[%s1 + $0x100] sm:$0xff]
  %v689 = vld [vmem:[%s1 + $0x108] sm:$0xff]
  %v690 = vld [vmem:[%s1 + $0x110] sm:$0xff]
  %v691 = vld [vmem:[%s1 + $0x118] sm:$0xff]
  %v692 = vld [vmem:[%s1 + $0x120] sm:$0xff]
  %v693 = vld [vmem:[%s1 + $0x128] sm:$0xff]
  %v694 = vld [vmem:[%s1 + $0x130] sm:$0xff]
  %v695 = vld [vmem:[%s1 + $0x138] sm:$0xff]
  %v696 = vld [vmem:[%s1 + $0x140] sm:$0xff]
  %v697 = vld [vmem:[%s1 + $0x148] sm:$0xff]
  %v698 = vld [vmem:[%s1 + $0x150] sm:$0xff]
  %v699 = vld [vmem:[%s1 + $0x158] sm:$0xff]
  %v700 = vld [vmem:[%s1 + $0x160] sm:$0xff]
  %v701 = vld [vmem:[%s1 + $0x168] sm:$0xff]
  %v702 = vld [vmem:[%s1 + $0x170] sm:$0xff]
  %v703 = vld [vmem:[%s1 + $0x178] sm:$0xff]
  %v704 = vld [vmem:[%s1 + $0x180] sm:$0xff]
  %v705 = vld [vmem:[%s1 + $0x188] sm:$0xff]
  %v706 = vld [vmem:[%s1 + $0x190] sm:$0xff]
  %v707 = vld [vmem:[%s1 + $0x198] sm:$0xff]
  %v708 = vld [vmem:[%s1 + $0x1a0] sm:$0xff]
  %v709 = vld [vmem:[%s1 + $0x1a8] sm:$0xff]
  %v710 = vld [vmem:[%s1 + $0x1b0] sm:$0xff]
  %v711 = vld [vmem:[%s1 + $0x1b8] sm:$0xff]
  %v712 = vld [vmem:[%s1 + $0x1c0] sm:$0xff]
  %v713 = vld [vmem:[%s1 + $0x1c8] sm:$0xff]
  %v714 = vld [vmem:[%s1 + $0x1d0] sm:$0xff]
  %v715 = vld [vmem:[%s1 + $0x1d8] sm:$0xff]
  %v716 = vld [vmem:[%s1 + $0x1e0] sm:$0xff]
  %v717 = vld [vmem:[%s1 + $0x1e8] sm:$0xff]
  %v718 = vld [vmem:[%s1 + $0x1f0] sm:$0xff]
  %v719 = vld [vmem:[%s1 + $0x1f8] sm:$0xff]
  %v720 = vld [vmem:[%s2] sm:$0x1]
  %v722 = vlaneseq
  %v723 = vshrl.u32 %v722, 7
  %v724 = vsub.s32 0, %v723
  %v725 = vrot.slane %v720, %v724
  %v855 = vlaneseq
  %v856 = vand.u32 %v855, 127
  %v857 = vlaneseq
  %v858 = vshrl.u32 %v857, 7
  %v859 = vsub.s32 %v856, %v858
  %v860 = vrot.slane %v528, %v859
  %v861 = vadd.s32 %v856, 4294967288
  %v862 = vlaneseq
  %v863 = vshrl.u32 %v862, 7
  %v864 = vsub.s32 %v861, %v863
  %v865 = vrot.slane %v529, %v864
  %vm866 = vcmask 130112
  %v867 = vsel %vm866, %v865, %v860
  %v868 = vadd.s32 %v856, 4294967280
  %v869 = vlaneseq
  %v870 = vshrl.u32 %v869, 7
  %v871 = vsub.s32 %v868, %v870
  %v872 = vrot.slane %v530, %v871
  %vm873 = vcmask 195712
  %v874 = vsel %vm873, %v872, %v867
  %v875 = vadd.s32 %v856, 4294967272
  %v876 = vlaneseq
  %v877 = vshrl.u32 %v876, 7
  %v878 = vsub.s32 %v875, %v877
  %v879 = vrot.slane %v531, %v878
  %vm880 = vcmask 261312
  %v881 = vsel %vm880, %v879, %v874
  %v882 = vadd.s32 %v856, 4294967264
  %v883 = vlaneseq
  %v884 = vshrl.u32 %v883, 7
  %v885 = vsub.s32 %v882, %v884
  %v886 = vrot.slane %v532, %v885
  %vm887 = vcmask 326912
  %v888 = vsel %vm887, %v886, %v881
  %v889 = vadd.s32 %v856, 4294967256
  %v890 = vlaneseq
  %v891 = vshrl.u32 %v890, 7
  %v892 = vsub.s32 %v889, %v891
  %v893 = vrot.slane %v533, %v892
  %vm894 = vcmask 392512
  %v895 = vsel %vm894, %v893, %v888
  %v896 = vadd.s32 %v856, 4294967248
  %v897 = vlaneseq
  %v898 = vshrl.u32 %v897, 7
  %v899 = vsub.s32 %v896, %v898
  %v900 = vrot.slane %v534, %v899
  %vm901 = vcmask 458112
  %v902 = vsel %vm901, %v900, %v895
  %v903 = vadd.s32 %v856, 4294967240
  %v904 = vlaneseq
  %v905 = vshrl.u32 %v904, 7
  %v906 = vsub.s32 %v903, %v905
  %v907 = vrot.slane %v535, %v906
  %vm908 = vcmask 523712
  %v909 = vsel %vm908, %v907, %v902
  %v910 = vadd.s32 %v856, 4294967232
  %v911 = vlaneseq
  %v912 = vshrl.u32 %v911, 7
  %v913 = vsub.s32 %v910, %v912
  %v914 = vrot.slane %v536, %v913
  %vm915 = vcmask 589312
  %v916 = vsel %vm915, %v914, %v909
  %v917 = vadd.s32 %v856, 4294967224
  %v918 = vlaneseq
  %v919 = vshrl.u32 %v918, 7
  %v920 = vsub.s32 %v917, %v919
  %v921 = vrot.slane %v537, %v920
  %vm922 = vcmask 654912
  %v923 = vsel %vm922, %v921, %v916
  %v924 = vadd.s32 %v856, 4294967216
  %v925 = vlaneseq
  %v926 = vshrl.u32 %v925, 7
  %v927 = vsub.s32 %v924, %v926
  %v928 = vrot.slane %v538, %v927
  %vm929 = vcmask 720512
  %v930 = vsel %vm929, %v928, %v923
  %v931 = vadd.s32 %v856, 4294967208
  %v932 = vlaneseq
  %v933 = vshrl.u32 %v932, 7
  %v934 = vsub.s32 %v931, %v933
  %v935 = vrot.slane %v539, %v934
  %vm936 = vcmask 786112
  %v937 = vsel %vm936, %v935, %v930
  %v938 = vadd.s32 %v856, 4294967200
  %v939 = vlaneseq
  %v940 = vshrl.u32 %v939, 7
  %v941 = vsub.s32 %v938, %v940
  %v942 = vrot.slane %v540, %v941
  %vm943 = vcmask 851712
  %v944 = vsel %vm943, %v942, %v937
  %v945 = vadd.s32 %v856, 4294967192
  %v946 = vlaneseq
  %v947 = vshrl.u32 %v946, 7
  %v948 = vsub.s32 %v945, %v947
  %v949 = vrot.slane %v541, %v948
  %vm950 = vcmask 917312
  %v951 = vsel %vm950, %v949, %v944
  %v952 = vadd.s32 %v856, 4294967184
  %v953 = vlaneseq
  %v954 = vshrl.u32 %v953, 7
  %v955 = vsub.s32 %v952, %v954
  %v956 = vrot.slane %v542, %v955
  %vm957 = vcmask 982912
  %v958 = vsel %vm957, %v956, %v951
  %v959 = vadd.s32 %v856, 4294967176
  %v960 = vlaneseq
  %v961 = vshrl.u32 %v960, 7
  %v962 = vsub.s32 %v959, %v961
  %v963 = vrot.slane %v543, %v962
  %vm964 = vcmask 1048512
  %v965 = vsel %vm964, %v963, %v958
  %v966 = vlaneseq
  %v967 = vshrl.u32 %v966, 7
  %v968 = vsub.s32 %v856, %v967
  %v969 = vrot.slane %v544, %v968
  %v970 = vlaneseq
  %v971 = vshrl.u32 %v970, 7
  %v972 = vsub.s32 %v861, %v971
  %v973 = vrot.slane %v545, %v972
  %v974 = vsel %vm866, %v973, %v969
  %v975 = vlaneseq
  %v976 = vshrl.u32 %v975, 7
  %v977 = vsub.s32 %v868, %v976
  %v978 = vrot.slane %v546, %v977
  %v979 = vsel %vm873, %v978, %v974
  %v980 = vlaneseq
  %v981 = vshrl.u32 %v980, 7
  %v982 = vsub.s32 %v875, %v981
  %v983 = vrot.slane %v547, %v982
  %v984 = vsel %vm880, %v983, %v979
  %v985 = vlaneseq
  %v986 = vshrl.u32 %v985, 7
  %v987 = vsub.s32 %v882, %v986
  %v988 = vrot.slane %v548, %v987
  %v989 = vsel %vm887, %v988, %v984
  %v990 = vlaneseq
  %v991 = vshrl.u32 %v990, 7
  %v992 = vsub.s32 %v889, %v991
  %v993 = vrot.slane %v549, %v992
  %v994 = vsel %vm894, %v993, %v989
  %v995 = vlaneseq
  %v996 = vshrl.u32 %v995, 7
  %v997 = vsub.s32 %v896, %v996
  %v998 = vrot.slane %v550, %v997
  %v999 = vsel %vm901, %v998, %v994
  %v1000 = vlaneseq
  %v1001 = vshrl.u32 %v1000, 7
  %v1002 = vsub.s32 %v903, %v1001
  %v1003 = vrot.slane %v551, %v1002
  %v1004 = vsel %vm908, %v1003, %v999
  %v1005 = vlaneseq
  %v1006 = vshrl.u32 %v1005, 7
  %v1007 = vsub.s32 %v910, %v1006
  %v1008 = vrot.slane %v552, %v1007
  %v1009 = vsel %vm915, %v1008, %v1004
  %v1010 = vlaneseq
  %v1011 = vshrl.u32 %v1010, 7
  %v1012 = vsub.s32 %v917, %v1011
  %v1013 = vrot.slane %v553, %v1012
  %v1014 = vsel %vm922, %v1013, %v1009
  %v1015 = vlaneseq
  %v1016 = vshrl.u32 %v1015, 7
  %v1017 = vsub.s32 %v924, %v1016
  %v1018 = vrot.slane %v554, %v1017
  %v1019 = vsel %vm929, %v1018, %v1014
  %v1020 = vlaneseq
  %v1021 = vshrl.u32 %v1020, 7
  %v1022 = vsub.s32 %v931, %v1021
  %v1023 = vrot.slane %v555, %v1022
  %v1024 = vsel %vm936, %v1023, %v1019
  %v1025 = vlaneseq
  %v1026 = vshrl.u32 %v1025, 7
  %v1027 = vsub.s32 %v938, %v1026
  %v1028 = vrot.slane %v556, %v1027
  %v1029 = vsel %vm943, %v1028, %v1024
  %v1030 = vlaneseq
  %v1031 = vshrl.u32 %v1030, 7
  %v1032 = vsub.s32 %v945, %v1031
  %v1033 = vrot.slane %v557, %v1032
  %v1034 = vsel %vm950, %v1033, %v1029
  %v1035 = vlaneseq
  %v1036 = vshrl.u32 %v1035, 7
  %v1037 = vsub.s32 %v952, %v1036
  %v1038 = vrot.slane %v558, %v1037
  %v1039 = vsel %vm957, %v1038, %v1034
  %v1040 = vlaneseq
  %v1041 = vshrl.u32 %v1040, 7
  %v1042 = vsub.s32 %v959, %v1041
  %v1043 = vrot.slane %v559, %v1042
  %v1044 = vsel %vm964, %v1043, %v1039
  %v1045 = vlaneseq
  %v1046 = vshrl.u32 %v1045, 7
  %v1047 = vsub.s32 %v856, %v1046
  %v1048 = vrot.slane %v560, %v1047
  %v1049 = vlaneseq
  %v1050 = vshrl.u32 %v1049, 7
  %v1051 = vsub.s32 %v861, %v1050
  %v1052 = vrot.slane %v561, %v1051
  %v1053 = vsel %vm866, %v1052, %v1048
  %v1054 = vlaneseq
  %v1055 = vshrl.u32 %v1054, 7
  %v1056 = vsub.s32 %v868, %v1055
  %v1057 = vrot.slane %v562, %v1056
  %v1058 = vsel %vm873, %v1057, %v1053
  %v1059 = vlaneseq
  %v1060 = vshrl.u32 %v1059, 7
  %v1061 = vsub.s32 %v875, %v1060
  %v1062 = vrot.slane %v563, %v1061
  %v1063 = vsel %vm880, %v1062, %v1058
  %v1064 = vlaneseq
  %v1065 = vshrl.u32 %v1064, 7
  %v1066 = vsub.s32 %v882, %v1065
  %v1067 = vrot.slane %v564, %v1066
  %v1068 = vsel %vm887, %v1067, %v1063
  %v1069 = vlaneseq
  %v1070 = vshrl.u32 %v1069, 7
  %v1071 = vsub.s32 %v889, %v1070
  %v1072 = vrot.slane %v565, %v1071
  %v1073 = vsel %vm894, %v1072, %v1068
  %v1074 = vlaneseq
  %v1075 = vshrl.u32 %v1074, 7
  %v1076 = vsub.s32 %v896, %v1075
  %v1077 = vrot.slane %v566, %v1076
  %v1078 = vsel %vm901, %v1077, %v1073
  %v1079 = vlaneseq
  %v1080 = vshrl.u32 %v1079, 7
  %v1081 = vsub.s32 %v903, %v1080
  %v1082 = vrot.slane %v567, %v1081
  %v1083 = vsel %vm908, %v1082, %v1078
  %v1084 = vlaneseq
  %v1085 = vshrl.u32 %v1084, 7
  %v1086 = vsub.s32 %v910, %v1085
  %v1087 = vrot.slane %v568, %v1086
  %v1088 = vsel %vm915, %v1087, %v1083
  %v1089 = vlaneseq
  %v1090 = vshrl.u32 %v1089, 7
  %v1091 = vsub.s32 %v917, %v1090
  %v1092 = vrot.slane %v569, %v1091
  %v1093 = vsel %vm922, %v1092, %v1088
  %v1094 = vlaneseq
  %v1095 = vshrl.u32 %v1094, 7
  %v1096 = vsub.s32 %v924, %v1095
  %v1097 = vrot.slane %v570, %v1096
  %v1098 = vsel %vm929, %v1097, %v1093
  %v1099 = vlaneseq
  %v1100 = vshrl.u32 %v1099, 7
  %v1101 = vsub.s32 %v931, %v1100
  %v1102 = vrot.slane %v571, %v1101
  %v1103 = vsel %vm936, %v1102, %v1098
  %v1104 = vlaneseq
  %v1105 = vshrl.u32 %v1104, 7
  %v1106 = vsub.s32 %v938, %v1105
  %v1107 = vrot.slane %v572, %v1106
  %v1108 = vsel %vm943, %v1107, %v1103
  %v1109 = vlaneseq
  %v1110 = vshrl.u32 %v1109, 7
  %v1111 = vsub.s32 %v945, %v1110
  %v1112 = vrot.slane %v573, %v1111
  %v1113 = vsel %vm950, %v1112, %v1108
  %v1114 = vlaneseq
  %v1115 = vshrl.u32 %v1114, 7
  %v1116 = vsub.s32 %v952, %v1115
  %v1117 = vrot.slane %v574, %v1116
  %v1118 = vsel %vm957, %v1117, %v1113
  %v1119 = vlaneseq
  %v1120 = vshrl.u32 %v1119, 7
  %v1121 = vsub.s32 %v959, %v1120
  %v1122 = vrot.slane %v575, %v1121
  %v1123 = vsel %vm964, %v1122, %v1118
  %v1124 = vlaneseq
  %v1125 = vshrl.u32 %v1124, 7
  %v1126 = vsub.s32 %v856, %v1125
  %v1127 = vrot.slane %v576, %v1126
  %v1128 = vlaneseq
  %v1129 = vshrl.u32 %v1128, 7
  %v1130 = vsub.s32 %v861, %v1129
  %v1131 = vrot.slane %v577, %v1130
  %v1132 = vsel %vm866, %v1131, %v1127
  %v1133 = vlaneseq
  %v1134 = vshrl.u32 %v1133, 7
  %v1135 = vsub.s32 %v868, %v1134
  %v1136 = vrot.slane %v578, %v1135
  %v1137 = vsel %vm873, %v1136, %v1132
  %v1138 = vlaneseq
  %v1139 = vshrl.u32 %v1138, 7
  %v1140 = vsub.s32 %v875, %v1139
  %v1141 = vrot.slane %v579, %v1140
  %v1142 = vsel %vm880, %v1141, %v1137
  %v1143 = vlaneseq
  %v1144 = vshrl.u32 %v1143, 7
  %v1145 = vsub.s32 %v882, %v1144
  %v1146 = vrot.slane %v580, %v1145
  %v1147 = vsel %vm887, %v1146, %v1142
  %v1148 = vlaneseq
  %v1149 = vshrl.u32 %v1148, 7
  %v1150 = vsub.s32 %v889, %v1149
  %v1151 = vrot.slane %v581, %v1150
  %v1152 = vsel %vm894, %v1151, %v1147
  %v1153 = vlaneseq
  %v1154 = vshrl.u32 %v1153, 7
  %v1155 = vsub.s32 %v896, %v1154
  %v1156 = vrot.slane %v582, %v1155
  %v1157 = vsel %vm901, %v1156, %v1152
  %v1158 = vlaneseq
  %v1159 = vshrl.u32 %v1158, 7
  %v1160 = vsub.s32 %v903, %v1159
  %v1161 = vrot.slane %v583, %v1160
  %v1162 = vsel %vm908, %v1161, %v1157
  %v1163 = vlaneseq
  %v1164 = vshrl.u32 %v1163, 7
  %v1165 = vsub.s32 %v910, %v1164
  %v1166 = vrot.slane %v584, %v1165
  %v1167 = vsel %vm915, %v1166, %v1162
  %v1168 = vlaneseq
  %v1169 = vshrl.u32 %v1168, 7
  %v1170 = vsub.s32 %v917, %v1169
  %v1171 = vrot.slane %v585, %v1170
  %v1172 = vsel %vm922, %v1171, %v1167
  %v1173 = vlaneseq
  %v1174 = vshrl.u32 %v1173, 7
  %v1175 = vsub.s32 %v924, %v1174
  %v1176 = vrot.slane %v586, %v1175
  %v1177 = vsel %vm929, %v1176, %v1172
  %v1178 = vlaneseq
  %v1179 = vshrl.u32 %v1178, 7
  %v1180 = vsub.s32 %v931, %v1179
  %v1181 = vrot.slane %v587, %v1180
  %v1182 = vsel %vm936, %v1181, %v1177
  %v1183 = vlaneseq
  %v1184 = vshrl.u32 %v1183, 7
  %v1185 = vsub.s32 %v938, %v1184
  %v1186 = vrot.slane %v588, %v1185
  %v1187 = vsel %vm943, %v1186, %v1182
  %v1188 = vlaneseq
  %v1189 = vshrl.u32 %v1188, 7
  %v1190 = vsub.s32 %v945, %v1189
  %v1191 = vrot.slane %v589, %v1190
  %v1192 = vsel %vm950, %v1191, %v1187
  %v1193 = vlaneseq
  %v1194 = vshrl.u32 %v1193, 7
  %v1195 = vsub.s32 %v952, %v1194
  %v1196 = vrot.slane %v590, %v1195
  %v1197 = vsel %vm957, %v1196, %v1192
  %v1198 = vlaneseq
  %v1199 = vshrl.u32 %v1198, 7
  %v1200 = vsub.s32 %v959, %v1199
  %v1201 = vrot.slane %v591, %v1200
  %v1202 = vsel %vm964, %v1201, %v1197
  %v1203 = vlaneseq
  %v1204 = vshrl.u32 %v1203, 7
  %v1205 = vsub.s32 %v856, %v1204
  %v1206 = vrot.slane %v592, %v1205
  %v1207 = vlaneseq
  %v1208 = vshrl.u32 %v1207, 7
  %v1209 = vsub.s32 %v861, %v1208
  %v1210 = vrot.slane %v593, %v1209
  %v1211 = vsel %vm866, %v1210, %v1206
  %v1212 = vlaneseq
  %v1213 = vshrl.u32 %v1212, 7
  %v1214 = vsub.s32 %v868, %v1213
  %v1215 = vrot.slane %v594, %v1214
  %v1216 = vsel %vm873, %v1215, %v1211
  %v1217 = vlaneseq
  %v1218 = vshrl.u32 %v1217, 7
  %v1219 = vsub.s32 %v875, %v1218
  %v1220 = vrot.slane %v595, %v1219
  %v1221 = vsel %vm880, %v1220, %v1216
  %v1222 = vlaneseq
  %v1223 = vshrl.u32 %v1222, 7
  %v1224 = vsub.s32 %v882, %v1223
  %v1225 = vrot.slane %v596, %v1224
  %v1226 = vsel %vm887, %v1225, %v1221
  %v1227 = vlaneseq
  %v1228 = vshrl.u32 %v1227, 7
  %v1229 = vsub.s32 %v889, %v1228
  %v1230 = vrot.slane %v597, %v1229
  %v1231 = vsel %vm894, %v1230, %v1226
  %v1232 = vlaneseq
  %v1233 = vshrl.u32 %v1232, 7
  %v1234 = vsub.s32 %v896, %v1233
  %v1235 = vrot.slane %v598, %v1234
  %v1236 = vsel %vm901, %v1235, %v1231
  %v1237 = vlaneseq
  %v1238 = vshrl.u32 %v1237, 7
  %v1239 = vsub.s32 %v903, %v1238
  %v1240 = vrot.slane %v599, %v1239
  %v1241 = vsel %vm908, %v1240, %v1236
  %v1242 = vlaneseq
  %v1243 = vshrl.u32 %v1242, 7
  %v1244 = vsub.s32 %v910, %v1243
  %v1245 = vrot.slane %v600, %v1244
  %v1246 = vsel %vm915, %v1245, %v1241
  %v1247 = vlaneseq
  %v1248 = vshrl.u32 %v1247, 7
  %v1249 = vsub.s32 %v917, %v1248
  %v1250 = vrot.slane %v601, %v1249
  %v1251 = vsel %vm922, %v1250, %v1246
  %v1252 = vlaneseq
  %v1253 = vshrl.u32 %v1252, 7
  %v1254 = vsub.s32 %v924, %v1253
  %v1255 = vrot.slane %v602, %v1254
  %v1256 = vsel %vm929, %v1255, %v1251
  %v1257 = vlaneseq
  %v1258 = vshrl.u32 %v1257, 7
  %v1259 = vsub.s32 %v931, %v1258
  %v1260 = vrot.slane %v603, %v1259
  %v1261 = vsel %vm936, %v1260, %v1256
  %v1262 = vlaneseq
  %v1263 = vshrl.u32 %v1262, 7
  %v1264 = vsub.s32 %v938, %v1263
  %v1265 = vrot.slane %v604, %v1264
  %v1266 = vsel %vm943, %v1265, %v1261
  %v1267 = vlaneseq
  %v1268 = vshrl.u32 %v1267, 7
  %v1269 = vsub.s32 %v945, %v1268
  %v1270 = vrot.slane %v605, %v1269
  %v1271 = vsel %vm950, %v1270, %v1266
  %v1272 = vlaneseq
  %v1273 = vshrl.u32 %v1272, 7
  %v1274 = vsub.s32 %v952, %v1273
  %v1275 = vrot.slane %v606, %v1274
  %v1276 = vsel %vm957, %v1275, %v1271
  %v1277 = vlaneseq
  %v1278 = vshrl.u32 %v1277, 7
  %v1279 = vsub.s32 %v959, %v1278
  %v1280 = vrot.slane %v607, %v1279
  %v1281 = vsel %vm964, %v1280, %v1276
  %v1282 = vlaneseq
  %v1283 = vshrl.u32 %v1282, 7
  %v1284 = vsub.s32 %v856, %v1283
  %v1285 = vrot.slane %v608, %v1284
  %v1286 = vlaneseq
  %v1287 = vshrl.u32 %v1286, 7
  %v1288 = vsub.s32 %v861, %v1287
  %v1289 = vrot.slane %v609, %v1288
  %v1290 = vsel %vm866, %v1289, %v1285
  %v1291 = vlaneseq
  %v1292 = vshrl.u32 %v1291, 7
  %v1293 = vsub.s32 %v868, %v1292
  %v1294 = vrot.slane %v610, %v1293
  %v1295 = vsel %vm873, %v1294, %v1290
  %v1296 = vlaneseq
  %v1297 = vshrl.u32 %v1296, 7
  %v1298 = vsub.s32 %v875, %v1297
  %v1299 = vrot.slane %v611, %v1298
  %v1300 = vsel %vm880, %v1299, %v1295
  %v1301 = vlaneseq
  %v1302 = vshrl.u32 %v1301, 7
  %v1303 = vsub.s32 %v882, %v1302
  %v1304 = vrot.slane %v612, %v1303
  %v1305 = vsel %vm887, %v1304, %v1300
  %v1306 = vlaneseq
  %v1307 = vshrl.u32 %v1306, 7
  %v1308 = vsub.s32 %v889, %v1307
  %v1309 = vrot.slane %v613, %v1308
  %v1310 = vsel %vm894, %v1309, %v1305
  %v1311 = vlaneseq
  %v1312 = vshrl.u32 %v1311, 7
  %v1313 = vsub.s32 %v896, %v1312
  %v1314 = vrot.slane %v614, %v1313
  %v1315 = vsel %vm901, %v1314, %v1310
  %v1316 = vlaneseq
  %v1317 = vshrl.u32 %v1316, 7
  %v1318 = vsub.s32 %v903, %v1317
  %v1319 = vrot.slane %v615, %v1318
  %v1320 = vsel %vm908, %v1319, %v1315
  %v1321 = vlaneseq
  %v1322 = vshrl.u32 %v1321, 7
  %v1323 = vsub.s32 %v910, %v1322
  %v1324 = vrot.slane %v616, %v1323
  %v1325 = vsel %vm915, %v1324, %v1320
  %v1326 = vlaneseq
  %v1327 = vshrl.u32 %v1326, 7
  %v1328 = vsub.s32 %v917, %v1327
  %v1329 = vrot.slane %v617, %v1328
  %v1330 = vsel %vm922, %v1329, %v1325
  %v1331 = vlaneseq
  %v1332 = vshrl.u32 %v1331, 7
  %v1333 = vsub.s32 %v924, %v1332
  %v1334 = vrot.slane %v618, %v1333
  %v1335 = vsel %vm929, %v1334, %v1330
  %v1336 = vlaneseq
  %v1337 = vshrl.u32 %v1336, 7
  %v1338 = vsub.s32 %v931, %v1337
  %v1339 = vrot.slane %v619, %v1338
  %v1340 = vsel %vm936, %v1339, %v1335
  %v1341 = vlaneseq
  %v1342 = vshrl.u32 %v1341, 7
  %v1343 = vsub.s32 %v938, %v1342
  %v1344 = vrot.slane %v620, %v1343
  %v1345 = vsel %vm943, %v1344, %v1340
  %v1346 = vlaneseq
  %v1347 = vshrl.u32 %v1346, 7
  %v1348 = vsub.s32 %v945, %v1347
  %v1349 = vrot.slane %v621, %v1348
  %v1350 = vsel %vm950, %v1349, %v1345
  %v1351 = vlaneseq
  %v1352 = vshrl.u32 %v1351, 7
  %v1353 = vsub.s32 %v952, %v1352
  %v1354 = vrot.slane %v622, %v1353
  %v1355 = vsel %vm957, %v1354, %v1350
  %v1356 = vlaneseq
  %v1357 = vshrl.u32 %v1356, 7
  %v1358 = vsub.s32 %v959, %v1357
  %v1359 = vrot.slane %v623, %v1358
  %v1360 = vsel %vm964, %v1359, %v1355
  %v1361 = vlaneseq
  %v1362 = vshrl.u32 %v1361, 7
  %v1363 = vsub.s32 %v856, %v1362
  %v1364 = vrot.slane %v624, %v1363
  %v1365 = vlaneseq
  %v1366 = vshrl.u32 %v1365, 7
  %v1367 = vsub.s32 %v861, %v1366
  %v1368 = vrot.slane %v625, %v1367
  %v1369 = vsel %vm866, %v1368, %v1364
  %v1370 = vlaneseq
  %v1371 = vshrl.u32 %v1370, 7
  %v1372 = vsub.s32 %v868, %v1371
  %v1373 = vrot.slane %v626, %v1372
  %v1374 = vsel %vm873, %v1373, %v1369
  %v1375 = vlaneseq
  %v1376 = vshrl.u32 %v1375, 7
  %v1377 = vsub.s32 %v875, %v1376
  %v1378 = vrot.slane %v627, %v1377
  %v1379 = vsel %vm880, %v1378, %v1374
  %v1380 = vlaneseq
  %v1381 = vshrl.u32 %v1380, 7
  %v1382 = vsub.s32 %v882, %v1381
  %v1383 = vrot.slane %v628, %v1382
  %v1384 = vsel %vm887, %v1383, %v1379
  %v1385 = vlaneseq
  %v1386 = vshrl.u32 %v1385, 7
  %v1387 = vsub.s32 %v889, %v1386
  %v1388 = vrot.slane %v629, %v1387
  %v1389 = vsel %vm894, %v1388, %v1384
  %v1390 = vlaneseq
  %v1391 = vshrl.u32 %v1390, 7
  %v1392 = vsub.s32 %v896, %v1391
  %v1393 = vrot.slane %v630, %v1392
  %v1394 = vsel %vm901, %v1393, %v1389
  %v1395 = vlaneseq
  %v1396 = vshrl.u32 %v1395, 7
  %v1397 = vsub.s32 %v903, %v1396
  %v1398 = vrot.slane %v631, %v1397
  %v1399 = vsel %vm908, %v1398, %v1394
  %v1400 = vlaneseq
  %v1401 = vshrl.u32 %v1400, 7
  %v1402 = vsub.s32 %v910, %v1401
  %v1403 = vrot.slane %v632, %v1402
  %v1404 = vsel %vm915, %v1403, %v1399
  %v1405 = vlaneseq
  %v1406 = vshrl.u32 %v1405, 7
  %v1407 = vsub.s32 %v917, %v1406
  %v1408 = vrot.slane %v633, %v1407
  %v1409 = vsel %vm922, %v1408, %v1404
  %v1410 = vlaneseq
  %v1411 = vshrl.u32 %v1410, 7
  %v1412 = vsub.s32 %v924, %v1411
  %v1413 = vrot.slane %v634, %v1412
  %v1414 = vsel %vm929, %v1413, %v1409
  %v1415 = vlaneseq
  %v1416 = vshrl.u32 %v1415, 7
  %v1417 = vsub.s32 %v931, %v1416
  %v1418 = vrot.slane %v635, %v1417
  %v1419 = vsel %vm936, %v1418, %v1414
  %v1420 = vlaneseq
  %v1421 = vshrl.u32 %v1420, 7
  %v1422 = vsub.s32 %v938, %v1421
  %v1423 = vrot.slane %v636, %v1422
  %v1424 = vsel %vm943, %v1423, %v1419
  %v1425 = vlaneseq
  %v1426 = vshrl.u32 %v1425, 7
  %v1427 = vsub.s32 %v945, %v1426
  %v1428 = vrot.slane %v637, %v1427
  %v1429 = vsel %vm950, %v1428, %v1424
  %v1430 = vlaneseq
  %v1431 = vshrl.u32 %v1430, 7
  %v1432 = vsub.s32 %v952, %v1431
  %v1433 = vrot.slane %v638, %v1432
  %v1434 = vsel %vm957, %v1433, %v1429
  %v1435 = vlaneseq
  %v1436 = vshrl.u32 %v1435, 7
  %v1437 = vsub.s32 %v959, %v1436
  %v1438 = vrot.slane %v639, %v1437
  %v1439 = vsel %vm964, %v1438, %v1434
  %v1440 = vlaneseq
  %v1441 = vshrl.u32 %v1440, 7
  %v1442 = vsub.s32 %v856, %v1441
  %v1443 = vrot.slane %v640, %v1442
  %v1444 = vlaneseq
  %v1445 = vshrl.u32 %v1444, 7
  %v1446 = vsub.s32 %v861, %v1445
  %v1447 = vrot.slane %v641, %v1446
  %v1448 = vsel %vm866, %v1447, %v1443
  %v1449 = vlaneseq
  %v1450 = vshrl.u32 %v1449, 7
  %v1451 = vsub.s32 %v868, %v1450
  %v1452 = vrot.slane %v642, %v1451
  %v1453 = vsel %vm873, %v1452, %v1448
  %v1454 = vlaneseq
  %v1455 = vshrl.u32 %v1454, 7
  %v1456 = vsub.s32 %v875, %v1455
  %v1457 = vrot.slane %v643, %v1456
  %v1458 = vsel %vm880, %v1457, %v1453
  %v1459 = vlaneseq
  %v1460 = vshrl.u32 %v1459, 7
  %v1461 = vsub.s32 %v882, %v1460
  %v1462 = vrot.slane %v644, %v1461
  %v1463 = vsel %vm887, %v1462, %v1458
  %v1464 = vlaneseq
  %v1465 = vshrl.u32 %v1464, 7
  %v1466 = vsub.s32 %v889, %v1465
  %v1467 = vrot.slane %v645, %v1466
  %v1468 = vsel %vm894, %v1467, %v1463
  %v1469 = vlaneseq
  %v1470 = vshrl.u32 %v1469, 7
  %v1471 = vsub.s32 %v896, %v1470
  %v1472 = vrot.slane %v646, %v1471
  %v1473 = vsel %vm901, %v1472, %v1468
  %v1474 = vlaneseq
  %v1475 = vshrl.u32 %v1474, 7
  %v1476 = vsub.s32 %v903, %v1475
  %v1477 = vrot.slane %v647, %v1476
  %v1478 = vsel %vm908, %v1477, %v1473
  %v1479 = vlaneseq
  %v1480 = vshrl.u32 %v1479, 7
  %v1481 = vsub.s32 %v910, %v1480
  %v1482 = vrot.slane %v648, %v1481
  %v1483 = vsel %vm915, %v1482, %v1478
  %v1484 = vlaneseq
  %v1485 = vshrl.u32 %v1484, 7
  %v1486 = vsub.s32 %v917, %v1485
  %v1487 = vrot.slane %v649, %v1486
  %v1488 = vsel %vm922, %v1487, %v1483
  %v1489 = vlaneseq
  %v1490 = vshrl.u32 %v1489, 7
  %v1491 = vsub.s32 %v924, %v1490
  %v1492 = vrot.slane %v650, %v1491
  %v1493 = vsel %vm929, %v1492, %v1488
  %v1494 = vlaneseq
  %v1495 = vshrl.u32 %v1494, 7
  %v1496 = vsub.s32 %v931, %v1495
  %v1497 = vrot.slane %v651, %v1496
  %v1498 = vsel %vm936, %v1497, %v1493
  %v1499 = vlaneseq
  %v1500 = vshrl.u32 %v1499, 7
  %v1501 = vsub.s32 %v938, %v1500
  %v1502 = vrot.slane %v652, %v1501
  %v1503 = vsel %vm943, %v1502, %v1498
  %v1504 = vlaneseq
  %v1505 = vshrl.u32 %v1504, 7
  %v1506 = vsub.s32 %v945, %v1505
  %v1507 = vrot.slane %v653, %v1506
  %v1508 = vsel %vm950, %v1507, %v1503
  %v1509 = vlaneseq
  %v1510 = vshrl.u32 %v1509, 7
  %v1511 = vsub.s32 %v952, %v1510
  %v1512 = vrot.slane %v654, %v1511
  %v1513 = vsel %vm957, %v1512, %v1508
  %v1514 = vlaneseq
  %v1515 = vshrl.u32 %v1514, 7
  %v1516 = vsub.s32 %v959, %v1515
  %v1517 = vrot.slane %v655, %v1516
  %v1518 = vsel %vm964, %v1517, %v1513
  %vm1519 = vcmask 1041409
  %v1520 = vsel %vm1519, %v1281, %v965
  %v1521 = vsel %vm1519, %v1360, %v1044
  %v1522 = vsel %vm1519, %v1439, %v1123
  %v1523 = vsel %vm1519, %v1518, %v1202
  %1528 = vmatprep.subr.mxu0 0.0
  %1529 = vmatpush1.msra.mxu0 %v656
  %1530 = vmatprep.subr.mxu0 0.0
  %1531 = vmatpush1.msra.mxu0 %v657
  %1532 = vmatprep.subr.mxu0 0.0
  %1533 = vmatpush1.msra.mxu0 %v658
  %1534 = vmatprep.subr.mxu0 0.0
  %1535 = vmatpush1.msra.mxu0 %v659
  %1536 = vmatprep.subr.mxu0 0.0
  %1537 = vmatpush1.msra.mxu0 %v660
  %1538 = vmatprep.subr.mxu0 0.0
  %1539 = vmatpush1.msra.mxu0 %v661
  %1540 = vmatprep.subr.mxu0 0.0
  %1541 = vmatpush1.msra.mxu0 %v662
  %1542 = vmatprep.subr.mxu0 0.0
  %1543 = vmatpush1.msra.mxu0 %v663
  %1544 = vmatprep.subr.mxu0 0.0
  %1545 = vmatpush1.msra.mxu0 %v664
  %1546 = vmatprep.subr.mxu0 0.0
  %1547 = vmatpush1.msra.mxu0 %v665
  %1548 = vmatprep.subr.mxu0 0.0
  %1549 = vmatpush1.msra.mxu0 %v666
  %1550 = vmatprep.subr.mxu0 0.0
  %1551 = vmatpush1.msra.mxu0 %v667
  %1552 = vmatprep.subr.mxu0 0.0
  %1553 = vmatpush1.msra.mxu0 %v668
  %1554 = vmatprep.subr.mxu0 0.0
  %1555 = vmatpush1.msra.mxu0 %v669
  %1556 = vmatprep.subr.mxu0 0.0
  %1557 = vmatpush1.msra.mxu0 %v670
  %1558 = vmatprep.subr.mxu0 0.0
  %1559 = vmatpush1.msra.mxu0 %v671
  %1560 = vmatprep.subr.mxu0 0.0
  %1561 = vmatpush1.msra.mxu0 %v672
  %1562 = vmatprep.subr.mxu0 0.0
  %1563 = vmatpush1.msra.mxu0 %v673
  %1564 = vmatprep.subr.mxu0 0.0
  %1565 = vmatpush1.msra.mxu0 %v674
  %1566 = vmatprep.subr.mxu0 0.0
  %1567 = vmatpush1.msra.mxu0 %v675
  %1568 = vmatprep.subr.mxu0 0.0
  %1569 = vmatpush1.msra.mxu0 %v676
  %1570 = vmatprep.subr.mxu0 0.0
  %1571 = vmatpush1.msra.mxu0 %v677
  %1572 = vmatprep.subr.mxu0 0.0
  %1573 = vmatpush1.msra.mxu0 %v678
  %1574 = vmatprep.subr.mxu0 0.0
  %1575 = vmatpush1.msra.mxu0 %v679
  %1576 = vmatprep.subr.mxu0 0.0
  %1577 = vmatpush1.msra.mxu0 %v680
  %1578 = vmatprep.subr.mxu0 0.0
  %1579 = vmatpush1.msra.mxu0 %v681
  %1580 = vmatprep.subr.mxu0 0.0
  %1581 = vmatpush1.msra.mxu0 %v682
  %1582 = vmatprep.subr.mxu0 0.0
  %1583 = vmatpush1.msra.mxu0 %v683
  %1584 = vmatprep.subr.mxu0 0.0
  %1585 = vmatpush1.msra.mxu0 %v684
  %1586 = vmatprep.subr.mxu0 0.0
  %1587 = vmatpush1.msra.mxu0 %v685
  %1588 = vmatprep.subr.mxu0 0.0
  %1589 = vmatpush1.msra.mxu0 %v686
  %1590 = vmatprep.subr.mxu0 0.0
  %1591 = vmatpush1.msra.mxu0 %v687
  %1592 = vmatprep.mubr.f32.mxu0 %v1521
  %1593 = vmatmul.mubr.f32.gmra.mrb[0].mxu0 %v1520
  %v1594 = vpop.f32.mrb[0].mxu0
  %v1595 = vadd.f32 %v725, %v1594
  %v1596 = vpop.f32.mrb[0].mxu0
  %1597 = vdwg.mxu0
  %1598 = vmatprep.subr.mxu0 0.0
  %1599 = vmatpush1.msra.mxu0 %v688
  %1600 = vmatprep.subr.mxu0 0.0
  %1601 = vmatpush1.msra.mxu0 %v689
  %1602 = vmatprep.subr.mxu0 0.0
  %1603 = vmatpush1.msra.mxu0 %v690
  %1604 = vmatprep.subr.mxu0 0.0
  %1605 = vmatpush1.msra.mxu0 %v691
  %1606 = vmatprep.subr.mxu0 0.0
  %1607 = vmatpush1.msra.mxu0 %v692
  %1608 = vmatprep.subr.mxu0 0.0
  %1609 = vmatpush1.msra.mxu0 %v693
  %1610 = vmatprep.subr.mxu0 0.0
  %1611 = vmatpush1.msra.mxu0 %v694
  %1612 = vmatprep.subr.mxu0 0.0
  %1613 = vmatpush1.msra.mxu0 %v695
  %1614 = vmatprep.subr.mxu0 0.0
  %1615 = vmatpush1.msra.mxu0 %v696
  %1616 = vmatprep.subr.mxu0 0.0
  %1617 = vmatpush1.msra.mxu0 %v697
  %1618 = vmatprep.subr.mxu0 0.0
  %1619 = vmatpush1.msra.mxu0 %v698
  %1620 = vmatprep.subr.mxu0 0.0
  %1621 = vmatpush1.msra.mxu0 %v699
  %1622 = vmatprep.subr.mxu0 0.0
  %1623 = vmatpush1.msra.mxu0 %v700
  %1624 = vmatprep.subr.mxu0 0.0
  %1625 = vmatpush1.msra.mxu0 %v701
  %1626 = vmatprep.subr.mxu0 0.0
  %1627 = vmatpush1.msra.mxu0 %v702
  %1628 = vmatprep.subr.mxu0 0.0
  %1629 = vmatpush1.msra.mxu0 %v703
  %1630 = vmatprep.subr.mxu0 0.0
  %1631 = vmatpush1.msra.mxu0 %v704
  %1632 = vmatprep.subr.mxu0 0.0
  %1633 = vmatpush1.msra.mxu0 %v705
  %1634 = vmatprep.subr.mxu0 0.0
  %1635 = vmatpush1.msra.mxu0 %v706
  %1636 = vmatprep.subr.mxu0 0.0
  %1637 = vmatpush1.msra.mxu0 %v707
  %1638 = vmatprep.subr.mxu0 0.0
  %1639 = vmatpush1.msra.mxu0 %v708
  %1640 = vmatprep.subr.mxu0 0.0
  %1641 = vmatpush1.msra.mxu0 %v709
  %1642 = vmatprep.subr.mxu0 0.0
  %1643 = vmatpush1.msra.mxu0 %v710
  %1644 = vmatprep.subr.mxu0 0.0
  %1645 = vmatpush1.msra.mxu0 %v711
  %1646 = vmatprep.subr.mxu0 0.0
  %1647 = vmatpush1.msra.mxu0 %v712
  %1648 = vmatprep.subr.mxu0 0.0
  %1649 = vmatpush1.msra.mxu0 %v713
  %1650 = vmatprep.subr.mxu0 0.0
  %1651 = vmatpush1.msra.mxu0 %v714
  %1652 = vmatprep.subr.mxu0 0.0
  %1653 = vmatpush1.msra.mxu0 %v715
  %1654 = vmatprep.subr.mxu0 0.0
  %1655 = vmatpush1.msra.mxu0 %v716
  %1656 = vmatprep.subr.mxu0 0.0
  %1657 = vmatpush1.msra.mxu0 %v717
  %1658 = vmatprep.subr.mxu0 0.0
  %1659 = vmatpush1.msra.mxu0 %v718
  %1660 = vmatprep.subr.mxu0 0.0
  %1661 = vmatpush1.msra.mxu0 %v719
  %1662 = vmatprep.mubr.f32.mxu0 %v1523
  %1663 = vmatmul.mubr.f32.gmra.mrb[0].mxu0 %v1522
  %v1664 = vpop.f32.mrb[0].mxu0
  %v1665 = vadd.f32 %v1595, %v1664
  %v1666 = vpop.f32.mrb[0].mxu0
  %1667 = vdwg.mxu0
  %1668 = vst [vmem:[%s3] sm:$0x3] %v1665
  // Predicated region
  $region14: #{simple3dpose_head.1} parent=0 // pred_check
    _
  $region15: #{simple3dpose_head.1} parent=0 // pred_check_branch
    %1670 = sbr.rel (0) target = $region17
  $region16: #{simple3dpose_head.1} parent=0 // pred_region
    _
  $region17: #{simple3dpose_head.1} parent=0 // pred_fallthru
    _
  // Predicated region
  $region18: #{simple3dpose_head.1} parent=0 // pred_check
    _
  $region19: #{simple3dpose_head.1} parent=0 // pred_check_branch
    %1672 = sbr.rel (0) target = $region21
  $region20: #{simple3dpose_head.1} parent=0 // pred_region
    _
  $region21: #{simple3dpose_head.1} parent=0 // pred_fallthru
    _

</llo_original>
